<compile_context>
chip_gen: v7x
topology: tpu7x:2x2x1
jax: 0.10.0
libtpu: 0.0.40
codegen_flags: <defaults>
</compile_context>

<pallas_src>
import math
import functools

import jax
import jax.numpy as jnp
from jax.experimental import pallas as pl
from jax.experimental.pallas import tpu as pltpu


# ----------------------------------------------------------------------------
# Pallas kernels
# ----------------------------------------------------------------------------
def _fused_evd_kernel(x_ref, we_ref, be_ref, emb_ref, wd_ref, bd_ref,
                      z_ref, zq_ref, poh_ref):
    """Fused encoder-projection -> VQ straight-through -> decoder-projection.

    x_ref:   (N, P)   patchified input rows
    we_ref:  (P, D)   encoder weight,  be_ref: (1, D) bias
    emb_ref: (K, D)   VQ codebook
    wd_ref:  (D, P)   decoder weight,  bd_ref: (1, P) bias
    outputs: z (N, D), z_q (N, D), poh (N, P) (hardtanh(-pi, pi) fused)
    All operands are tiny (<100 KiB total) and stay resident in VMEM.
    """
    x = x_ref[...]
    z = jnp.dot(x, we_ref[...], preferred_element_type=jnp.float32) + be_ref[...]

    e = emb_ref[...]                                       # (K, D)
    # argmin_k ||z - e_k||^2 == argmin_k (||e_k||^2 - 2 z.e_k)  (||z||^2 is
    # constant per row and cannot change the argmin) -> skip the z^2 reduction.
    cross = jnp.dot(z, e.T, preferred_element_type=jnp.float32)        # (N, K)
    e2 = jnp.sum(e * e, axis=1, keepdims=True).T                       # (1, K)
    scores = e2 - 2.0 * cross                                          # (N, K)
    N, K = scores.shape
    min_s = jnp.min(scores, axis=1, keepdims=True)
    iota = jax.lax.broadcasted_iota(jnp.int32, (N, K), 1)
    # first-match tie-break (matches torch.min / argmin semantics)
    cand = jnp.where(scores == min_s, iota, jnp.int32(K))
    idx = jnp.min(cand, axis=1, keepdims=True)                         # (N, 1)
    onehot = (iota == idx).astype(jnp.float32)                         # (N, K)
    zq = jnp.dot(onehot, e, preferred_element_type=jnp.float32)        # (N, D)

    poh = jnp.dot(zq, wd_ref[...], preferred_element_type=jnp.float32) + bd_ref[...]
    poh = jnp.clip(poh, -math.pi, math.pi)                 # Hardtanh fused here

    z_ref[...] = z
    zq_ref[...] = zq
    poh_ref[...] = poh.astype(poh_ref.dtype)


def pallas_encode_vq_decode(x_patch, w_enc, b_enc, emb, w_dec, b_dec):
    N, P = x_patch.shape
    D = w_enc.shape[1]
    K = emb.shape[0]
    return pl.pallas_call(
        _fused_evd_kernel,
        out_shape=(
            jax.ShapeDtypeStruct((N, D), jnp.float32),
            jax.ShapeDtypeStruct((N, D), jnp.float32),
            jax.ShapeDtypeStruct((N, P), jnp.float32),
        ),
        grid=(1,),
        in_specs=[
            pl.BlockSpec((N, P), lambda i: (0, 0)),
            pl.BlockSpec((P, D), lambda i: (0, 0)),
            pl.BlockSpec((1, D), lambda i: (0, 0)),
            pl.BlockSpec((K, D), lambda i: (0, 0)),
            pl.BlockSpec((D, P), lambda i: (0, 0)),
            pl.BlockSpec((1, P), lambda i: (0, 0)),
        ],
        out_specs=(
            pl.BlockSpec((N, D), lambda i: (0, 0)),
            pl.BlockSpec((N, D), lambda i: (0, 0)),
            pl.BlockSpec((N, P), lambda i: (0, 0)),
        ),
        compiler_params=pltpu.CompilerParams(dimension_semantics=("arbitrary",)),
    )(x_patch, w_enc, b_enc, emb, w_dec, b_dec)


def _polar_pad_kernel(poh_ref, re_ref, im_ref):
    """exp(i*poh) (amplitude = 1) written into the origin-anchored window of a
    zero field of the conv size.  Aligned (offset-0) window store; the rest of
    the field is a full-block zero store."""
    p = poh_ref[...]                       # (B, H, W)
    _, H, W = p.shape
    re_ref[...] = jnp.zeros_like(re_ref)
    im_ref[...] = jnp.zeros_like(im_ref)
    re_ref[:, :H, :W] = jnp.cos(p)
    im_ref[:, :H, :W] = jnp.sin(p)


def pallas_polar_pad(poh, Hc, Wc):
    """poh: (B, H, W) phase -> zero-padded (B, Hc, Wc) real/imag of exp(i*poh)."""
    B, H, W = poh.shape
    return pl.pallas_call(
        _polar_pad_kernel,
        out_shape=(
            jax.ShapeDtypeStruct((B, Hc, Wc), jnp.float32),
            jax.ShapeDtypeStruct((B, Hc, Wc), jnp.float32),
        ),
        grid=(1,),
        in_specs=[pl.BlockSpec((B, H, W), lambda i: (0, 0, 0))],
        out_specs=(
            pl.BlockSpec((B, Hc, Wc), lambda i: (0, 0, 0)),
            pl.BlockSpec((B, Hc, Wc), lambda i: (0, 0, 0)),
        ),
        compiler_params=pltpu.CompilerParams(dimension_semantics=("arbitrary",)),
    )(poh)


def _cmul_kernel(hr_ref, hi_ref, ur_ref, ui_ref, or_ref, oi_ref):
    hr = hr_ref[...]                       # (1, L) transfer function (broadcast)
    hi = hi_ref[...]
    ur = ur_ref[...]                       # (B, L) spectrum
    ui = ui_ref[...]
    or_ref[...] = hr * ur - hi * ui
    oi_ref[...] = hr * ui + hi * ur


def pallas_complex_mul(h_real, h_imag, u_real, u_imag):
    """(H * U) on lane-dense 2-D slabs.  H: (1, L) broadcast over batch, U: (B, L)."""
    B, L = u_real.shape
    return pl.pallas_call(
        _cmul_kernel,
        out_shape=(
            jax.ShapeDtypeStruct((B, L), jnp.float32),
            jax.ShapeDtypeStruct((B, L), jnp.float32),
        ),
        grid=(1,),
        in_specs=[
            pl.BlockSpec((1, L), lambda i: (0, 0)),
            pl.BlockSpec((1, L), lambda i: (0, 0)),
            pl.BlockSpec((B, L), lambda i: (0, 0)),
            pl.BlockSpec((B, L), lambda i: (0, 0)),
        ],
        out_specs=(
            pl.BlockSpec((B, L), lambda i: (0, 0)),
            pl.BlockSpec((B, L), lambda i: (0, 0)),
        ),
        compiler_params=pltpu.CompilerParams(dimension_semantics=("arbitrary",)),
    )(h_real, h_imag, u_real, u_imag)


def _crop_intensity_kernel(ur_ref, ui_ref, o_ref, *, scale, W):
    # Origin-anchored crop fused into the kernel: only rows 0:H are DMA'd (via
    # the BlockSpec) and only lanes 0:W are read.
    ur = ur_ref[:, :, :W]
    ui = ui_ref[:, :, :W]
    inten = (ur * ur + ui * ui) * scale    # |U|^2 * scale_output
    o_ref[...] = jnp.sqrt(inten)           # pow(., 0.5)


def pallas_crop_intensity(u_real, u_imag, H, W, scale):
    """u_*: (B, Hc, Wc) back-propagated field -> (B, H, W) amplitude image."""
    B, Hc, Wc = u_real.shape
    return pl.pallas_call(
        functools.partial(_crop_intensity_kernel, scale=float(scale), W=W),
        out_shape=jax.ShapeDtypeStruct((B, H, W), jnp.float32),
        grid=(1,),
        in_specs=[
            pl.BlockSpec((B, H, Wc), lambda i: (0, 0, 0)),   # only rows 0:H fetched
            pl.BlockSpec((B, H, Wc), lambda i: (0, 0, 0)),
        ],
        out_specs=pl.BlockSpec((B, H, W), lambda i: (0, 0, 0)),
        compiler_params=pltpu.CompilerParams(dimension_semantics=("arbitrary",)),
    )(u_real, u_imag)


# ----------------------------------------------------------------------------
# Model (plain-JAX glue around the Pallas kernels)
# ----------------------------------------------------------------------------
class PHologenPallas:
    def __init__(self, input_channels=1, z_dim=128, K=64, ch_mult=(1, 2, 4),
                 img_size=16, feature_size=(6.4e-6, 6.4e-6),
                 wavelength_list=(638e-9, 520e-9, 450e-9),
                 distance_list=(0.1, 0.1, 0.1), scale_output=0.95,
                 pad_type="zero", seed=0):
        assert input_channels in (1, 3)
        self.C = input_channels
        self.z_dim = z_dim
        self.K = K
        self.img_size = img_size
        self.down = 2 ** (len(ch_mult) - 1)          # encoder down-sampling factor
        assert img_size % self.down == 0
        self.latent = img_size // self.down
        self.feature_size = feature_size
        self.wavelength_list = wavelength_list
        self.distance_list = distance_list
        self.scale_output = scale_output
        self.pad_type = pad_type
        self.input_resolution = (img_size, img_size)
        self.conv_size = (2 * img_size, 2 * img_size)

        # -------- deterministic parameter init (xavier uniform, zero bias) ----
        key = jax.random.PRNGKey(seed)
        k_enc, k_dec, k_emb = jax.random.split(key, 3)
        patch = self.down * self.down * self.C       # patchify feature size

        def xavier(k, shape):
            fan_in, fan_out = shape
            lim = math.sqrt(6.0 / (fan_in + fan_out))
            return jax.random.uniform(k, shape, jnp.float32, -lim, lim)

        self.w_enc = xavier(k_enc, (patch, z_dim))
        self.b_enc = jnp.zeros((1, z_dim), jnp.float32)
        self.w_dec = xavier(k_dec, (z_dim, patch))
        self.b_dec = jnp.zeros((1, patch), jnp.float32)
        # codebook: uniform(-1/K, 1/K)
        self.embedding = jax.random.uniform(
            k_emb, (K, z_dim), jnp.float32, -1.0 / K, 1.0 / K)

        # precompute ASM transfer functions H[idx] (detached constants), stored
        # flattened (1, Hc*Wc) so the complex-mul kernel is lane-dense.
        self.H = [self._asm_transfer_fn(i) for i in range(len(wavelength_list))]

    # -------------------- ASM transfer function H(fx, fy) ---------------------
    def _asm_transfer_fn(self, idx):
        ny, nx = self.conv_size
        dy, dx = self.feature_size
        wl = self.wavelength_list[idx]
        dist = self.distance_list[idx]
        fy = jnp.fft.fftfreq(ny, d=dy).astype(jnp.float32)
        fx = jnp.fft.fftfreq(nx, d=dx).astype(jnp.float32)
        FY, FX = jnp.meshgrid(fy, fx, indexing="ij")
        arg = (1.0 / wl) ** 2 - FX ** 2 - FY ** 2
        prop = arg > 0
        phase = 2.0 * jnp.pi * dist * jnp.sqrt(jnp.maximum(arg, 0.0))
        h_real = jnp.where(prop, jnp.cos(phase), 0.0).astype(jnp.float32)
        h_imag = jnp.where(prop, jnp.sin(phase), 0.0).astype(jnp.float32)
        return h_real.reshape(1, ny * nx), h_imag.reshape(1, ny * nx)

    # -------------- fused encoder -> VQ -> decoder (one pallas_call) ----------
    def encode_vq_decode(self, x_nchw):
        B, C, H, W = x_nchw.shape
        d = self.down
        h, w = H // d, W // d
        # patchify (cheap XLA transposes on tiny tensors)
        x = jnp.transpose(x_nchw, (0, 2, 3, 1))                         # NHWC
        x = x.reshape(B, h, d, w, d, C)
        x = jnp.transpose(x, (0, 1, 3, 2, 4, 5)).reshape(B * h * w, d * d * C)

        z_flat, zq_flat, poh_flat = pallas_encode_vq_decode(
            x, self.w_enc, self.b_enc, self.embedding, self.w_dec, self.b_dec)

        z_e_x = jnp.transpose(z_flat.reshape(B, h, w, self.z_dim), (0, 3, 1, 2))
        z_q_x = jnp.transpose(zq_flat.reshape(B, h, w, self.z_dim), (0, 3, 1, 2))
        # unpatchify the phase-only hologram
        y = poh_flat.reshape(B, h, w, d, d, C)
        y = jnp.transpose(y, (0, 1, 3, 2, 4, 5)).reshape(B, h * d, w * d, C)
        poh = jnp.transpose(y, (0, 3, 1, 2))                            # NCHW
        return z_e_x, z_q_x, poh

    # ----------------------------- recon_hologram -----------------------------
    def recon_hologram(self, poh_1ch, idx):
        # poh_1ch: (B, 1, H, W) phase-only hologram in [-pi, pi]
        B = poh_1ch.shape[0]
        H, W = self.input_resolution
        Hc, Wc = self.conv_size
        poh = poh_1ch.reshape(B, H, W)

        # exp(i*poh), zero-padded at the origin (pad fused into the kernel).
        f_real, f_imag = pallas_polar_pad(poh, Hc, Wc)
        field = jax.lax.complex(f_real, f_imag)

        # TODO(synk): FFT stays in plain JAX; ifftshift/fftshift are removed
        # exactly by the shift identity documented at the top of the file.
        spec = jnp.fft.fft2(field, norm="ortho")

        h_real, h_imag = self.H[idx]                                    # (1, Hc*Wc)
        sr = jnp.real(spec).reshape(B, Hc * Wc)
        si = jnp.imag(spec).reshape(B, Hc * Wc)
        pr, pi = pallas_complex_mul(h_real, h_imag, sr, si)             # (B, Hc*Wc)

        prod = jax.lax.complex(pr.reshape(B, Hc, Wc), pi.reshape(B, Hc, Wc))
        back = jnp.fft.ifft2(prod, norm="ortho")

        # origin-anchored crop + |U|^2*scale + sqrt, fused in one kernel.
        recon = pallas_crop_intensity(jnp.real(back), jnp.imag(back),
                                      H, W, self.scale_output)
        return recon.reshape(B, 1, H, W)

    # -------------------------------- forward ---------------------------------
    def forward(self, x_nchw):
        z_e_x, z_q_x, poh = self.encode_vq_decode(x_nchw)
        if self.C == 1:
            recon_img = self.recon_hologram(poh, 1)
        else:
            recon = [self.recon_hologram(poh[:, i:i + 1], i) for i in range(3)]
            recon_img = jnp.concatenate(recon, axis=1)
        return poh, recon_img, z_e_x, z_q_x


# ----------------------------------------------------------------------------
if __name__ == "__main__":
    model = PHologenPallas(input_channels=1, z_dim=128, K=64, ch_mult=(1, 2, 4),
                           img_size=16, feature_size=(6.4e-6, 6.4e-6),
                           wavelength_list=(638e-9, 520e-9, 450e-9),
                           distance_list=(0.1, 0.1, 0.1), scale_output=0.95,
                           seed=0)

    key = jax.random.PRNGKey(0)
    x = jax.random.normal(key, (2, 1, 16, 16), dtype=jnp.float32)      # NCHW input

    fwd = jax.jit(model.forward)
    poh, recon_img, z_e_x, z_q_x = fwd(x)
    jax.block_until_ready((poh, recon_img, z_e_x, z_q_x))

    assert poh.shape == (2, 1, 16, 16)
    assert recon_img.shape == (2, 1, 16, 16)
    assert z_e_x.shape == (2, 128, 4, 4)
    assert z_q_x.shape == (2, 128, 4, 4)
    assert bool(jnp.all(jnp.abs(poh) <= math.pi + 1e-5))
    assert bool(jnp.all(jnp.isfinite(recon_img)))
    print("KERNEL_OK")
</pallas_src>

<mosaic_0001>
module attributes {stable_mosaic.version = 11 : i64} {
  func.func @_fused_evd_kernel(%arg0: i32, %arg1: memref<32x16xf32, #tpu.memory_space<vmem>>, %arg2: memref<16x128xf32, #tpu.memory_space<vmem>>, %arg3: memref<1x128xf32, #tpu.memory_space<vmem>>, %arg4: memref<64x128xf32, #tpu.memory_space<vmem>>, %arg5: memref<128x16xf32, #tpu.memory_space<vmem>>, %arg6: memref<1x16xf32, #tpu.memory_space<vmem>>, %arg7: memref<32x128xf32, #tpu.memory_space<vmem>>, %arg8: memref<32x128xf32, #tpu.memory_space<vmem>>, %arg9: memref<32x16xf32, #tpu.memory_space<vmem>>) attributes {dimension_semantics = [#tpu.dimension_semantics<arbitrary>], iteration_bounds = array<i64: 1>, scalar_prefetch = 0 : i64, scratch_operands = 0 : i64, tpu.core_type = #tpu.core_type<tc>, window_params = [{pipeline_mode = #tpu.pipeline_mode<synchronous>, transform_indices = @transform_0, window_bounds = array<i64: 32, 16>}, {pipeline_mode = #tpu.pipeline_mode<synchronous>, transform_indices = @transform_1, window_bounds = array<i64: 16, 128>}, {pipeline_mode = #tpu.pipeline_mode<synchronous>, transform_indices = @transform_2, window_bounds = array<i64: 1, 128>}, {pipeline_mode = #tpu.pipeline_mode<synchronous>, transform_indices = @transform_3, window_bounds = array<i64: 64, 128>}, {pipeline_mode = #tpu.pipeline_mode<synchronous>, transform_indices = @transform_4, window_bounds = array<i64: 128, 16>}, {pipeline_mode = #tpu.pipeline_mode<synchronous>, transform_indices = @transform_5, window_bounds = array<i64: 1, 16>}, {pipeline_mode = #tpu.pipeline_mode<synchronous>, transform_indices = @transform_6, window_bounds = array<i64: 32, 128>}, {pipeline_mode = #tpu.pipeline_mode<synchronous>, transform_indices = @transform_7, window_bounds = array<i64: 32, 128>}, {pipeline_mode = #tpu.pipeline_mode<synchronous>, transform_indices = @transform_8, window_bounds = array<i64: 32, 16>}]} {
    %c0 = arith.constant 0 : index
    %c0_0 = arith.constant 0 : index
    %0 = vector.load %arg1[%c0, %c0_0] : memref<32x16xf32, #tpu.memory_space<vmem>>, vector<32x16xf32>
    %c0_1 = arith.constant 0 : index
    %c0_2 = arith.constant 0 : index
    %1 = vector.load %arg2[%c0_1, %c0_2] : memref<16x128xf32, #tpu.memory_space<vmem>>, vector<16x128xf32>
    %cst = arith.constant dense<0.000000e+00> : vector<32x128xf32>
    %2 = tpu.matmul %0, %1, %cst {dimension_numbers = #tpu.dot_dimension_numbers<[1], [0], [0], [1], [0, 0, 1, 1], [], []>} : vector<32x16xf32>, vector<16x128xf32>, vector<32x128xf32> -> vector<32x128xf32>
    %c0_3 = arith.constant 0 : index
    %c0_4 = arith.constant 0 : index
    %3 = vector.load %arg3[%c0_3, %c0_4] : memref<1x128xf32, #tpu.memory_space<vmem>>, vector<1x128xf32>
    %4 = vector.broadcast %3 : vector<1x128xf32> to vector<32x128xf32>
    %5 = arith.addf %2, %4 : vector<32x128xf32>
    %c0_5 = arith.constant 0 : index
    %c0_6 = arith.constant 0 : index
    %6 = vector.load %arg4[%c0_5, %c0_6] : memref<64x128xf32, #tpu.memory_space<vmem>>, vector<64x128xf32>
    %7 = tpu.transpose %6, [1, 0] : vector<64x128xf32> -> vector<128x64xf32>
    %cst_7 = arith.constant dense<0.000000e+00> : vector<32x64xf32>
    %8 = tpu.matmul %5, %7, %cst_7 {dimension_numbers = #tpu.dot_dimension_numbers<[1], [0], [0], [1], [0, 0, 1, 1], [], []>} : vector<32x128xf32>, vector<128x64xf32>, vector<32x64xf32> -> vector<32x64xf32>
    %9 = arith.mulf %6, %6 : vector<64x128xf32>
    %cst_8 = arith.constant dense<0.000000e+00> : vector<64xf32>
    %10 = vector.multi_reduction <add>, %9, %cst_8 [1] : vector<64x128xf32> to vector<64xf32>
    %11 = vector.shape_cast %10 : vector<64xf32> to vector<64x1xf32>
    %12 = tpu.transpose %11, [1, 0] : vector<64x1xf32> -> vector<1x64xf32>
    %cst_9 = arith.constant 2.000000e+00 : f32
    %13 = vector.broadcast %cst_9 : f32 to vector<32x64xf32>
    %14 = arith.mulf %13, %8 : vector<32x64xf32>
    %15 = vector.broadcast %12 : vector<1x64xf32> to vector<32x64xf32>
    %16 = arith.subf %15, %14 : vector<32x64xf32>
    %cst_10 = arith.constant dense<0x7F800000> : vector<32xf32>
    %17 = vector.multi_reduction <minimumf>, %16, %cst_10 [1] : vector<32x64xf32> to vector<32xf32>
    %18 = vector.shape_cast %17 : vector<32xf32> to vector<32x1xf32>
    %19 = tpu.iota {dimensions = array<i32: 1>} : vector<32x64xi32>
    %20 = vector.broadcast %18 : vector<32x1xf32> to vector<32x64xf32>
    %21 = arith.cmpf oeq, %16, %20 : vector<32x64xf32>
    %c64_i32 = arith.constant 64 : i32
    %22 = vector.broadcast %c64_i32 : i32 to vector<32x64xi32>
    %23 = arith.select %21, %19, %22 : vector<32x64xi1>, vector<32x64xi32>
    %cst_11 = arith.constant dense<2147483647> : vector<32xi32>
    %24 = vector.multi_reduction <minsi>, %23, %cst_11 [1] : vector<32x64xi32> to vector<32xi32>
    %25 = vector.shape_cast %24 : vector<32xi32> to vector<32x1xi32>
    %26 = vector.broadcast %25 : vector<32x1xi32> to vector<32x64xi32>
    %27 = arith.cmpi eq, %19, %26 : vector<32x64xi32>
    %28 = arith.extui %27 : vector<32x64xi1> to vector<32x64xi32>
    %29 = arith.sitofp %28 : vector<32x64xi32> to vector<32x64xf32>
    %cst_12 = arith.constant dense<0.000000e+00> : vector<32x128xf32>
    %30 = tpu.matmul %29, %6, %cst_12 {dimension_numbers = #tpu.dot_dimension_numbers<[1], [0], [0], [1], [0, 0, 1, 1], [], []>} : vector<32x64xf32>, vector<64x128xf32>, vector<32x128xf32> -> vector<32x128xf32>
    %c0_13 = arith.constant 0 : index
    %c0_14 = arith.constant 0 : index
    %31 = vector.load %arg5[%c0_13, %c0_14] : memref<128x16xf32, #tpu.memory_space<vmem>>, vector<128x16xf32>
    %cst_15 = arith.constant dense<0.000000e+00> : vector<32x16xf32>
    %32 = tpu.matmul %30, %31, %cst_15 {dimension_numbers = #tpu.dot_dimension_numbers<[1], [0], [0], [1], [0, 0, 1, 1], [], []>} : vector<32x128xf32>, vector<128x16xf32>, vector<32x16xf32> -> vector<32x16xf32>
    %c0_16 = arith.constant 0 : index
    %c0_17 = arith.constant 0 : index
    %33 = vector.load %arg6[%c0_16, %c0_17] : memref<1x16xf32, #tpu.memory_space<vmem>>, vector<1x16xf32>
    %34 = vector.broadcast %33 : vector<1x16xf32> to vector<32x16xf32>
    %35 = arith.addf %32, %34 : vector<32x16xf32>
    %cst_18 = arith.constant -3.14159274 : f32
    %cst_19 = arith.constant 3.14159274 : f32
    %36 = vector.broadcast %cst_18 : f32 to vector<32x16xf32>
    %37 = arith.maximumf %36, %35 : vector<32x16xf32>
    %38 = vector.broadcast %cst_19 : f32 to vector<32x16xf32>
    %39 = arith.minimumf %38, %37 : vector<32x16xf32>
    %c0_20 = arith.constant 0 : index
    %c0_21 = arith.constant 0 : index
    %40 = vector.load %arg7[%c0_20, %c0_21] : memref<32x128xf32, #tpu.memory_space<vmem>>, vector<32x128xf32>
    tpu.vector_store %arg7[%c0_20, %c0_21], %5 {strides = array<i32>} : memref<32x128xf32, #tpu.memory_space<vmem>>, vector<32x128xf32>,
    %c0_22 = arith.constant 0 : index
    %c0_23 = arith.constant 0 : index
    %41 = vector.load %arg8[%c0_22, %c0_23] : memref<32x128xf32, #tpu.memory_space<vmem>>, vector<32x128xf32>
    tpu.vector_store %arg8[%c0_22, %c0_23], %30 {strides = array<i32>} : memref<32x128xf32, #tpu.memory_space<vmem>>, vector<32x128xf32>,
    %c0_24 = arith.constant 0 : index
    %c0_25 = arith.constant 0 : index
    %42 = vector.load %arg9[%c0_24, %c0_25] : memref<32x16xf32, #tpu.memory_space<vmem>>, vector<32x16xf32>
    tpu.vector_store %arg9[%c0_24, %c0_25], %39 {strides = array<i32>} : memref<32x16xf32, #tpu.memory_space<vmem>>, vector<32x16xf32>,
    return
  }
  func.func @transform_0(%arg0: i32) -> (i32, i32) {
    %c0_i32 = arith.constant 0 : i32
    %c0_i32_0 = arith.constant 0 : i32
    %c0_i32_1 = arith.constant 0 : i32
    return %c0_i32, %c0_i32_0 : i32, i32
  }
  func.func @transform_1(%arg0: i32) -> (i32, i32) {
    %c0_i32 = arith.constant 0 : i32
    %c0_i32_0 = arith.constant 0 : i32
    %c0_i32_1 = arith.constant 0 : i32
    return %c0_i32, %c0_i32_0 : i32, i32
  }
  func.func @transform_2(%arg0: i32) -> (i32, i32) {
    %c0_i32 = arith.constant 0 : i32
    %c0_i32_0 = arith.constant 0 : i32
    %c0_i32_1 = arith.constant 0 : i32
    return %c0_i32, %c0_i32_0 : i32, i32
  }
  func.func @transform_3(%arg0: i32) -> (i32, i32) {
    %c0_i32 = arith.constant 0 : i32
    %c0_i32_0 = arith.constant 0 : i32
    %c0_i32_1 = arith.constant 0 : i32
    return %c0_i32, %c0_i32_0 : i32, i32
  }
  func.func @transform_4(%arg0: i32) -> (i32, i32) {
    %c0_i32 = arith.constant 0 : i32
    %c0_i32_0 = arith.constant 0 : i32
    %c0_i32_1 = arith.constant 0 : i32
    return %c0_i32, %c0_i32_0 : i32, i32
  }
  func.func @transform_5(%arg0: i32) -> (i32, i32) {
    %c0_i32 = arith.constant 0 : i32
    %c0_i32_0 = arith.constant 0 : i32
    %c0_i32_1 = arith.constant 0 : i32
    return %c0_i32, %c0_i32_0 : i32, i32
  }
  func.func @transform_6(%arg0: i32) -> (i32, i32) {
    %c0_i32 = arith.constant 0 : i32
    %c0_i32_0 = arith.constant 0 : i32
    %c0_i32_1 = arith.constant 0 : i32
    return %c0_i32, %c0_i32_0 : i32, i32
  }
  func.func @transform_7(%arg0: i32) -> (i32, i32) {
    %c0_i32 = arith.constant 0 : i32
    %c0_i32_0 = arith.constant 0 : i32
    %c0_i32_1 = arith.constant 0 : i32
    return %c0_i32, %c0_i32_0 : i32, i32
  }
  func.func @transform_8(%arg0: i32) -> (i32, i32) {
    %c0_i32 = arith.constant 0 : i32
    %c0_i32_0 = arith.constant 0 : i32
    %c0_i32_1 = arith.constant 0 : i32
    return %c0_i32, %c0_i32_0 : i32, i32
  }
}

module attributes {stable_mosaic.version = 11 : i64} {
  func.func @_polar_pad_kernel(%arg0: i32, %arg1: memref<2x16x16xf32, #tpu.memory_space<vmem>>, %arg2: memref<2x32x32xf32, #tpu.memory_space<vmem>>, %arg3: memref<2x32x32xf32, #tpu.memory_space<vmem>>) attributes {dimension_semantics = [#tpu.dimension_semantics<arbitrary>], iteration_bounds = array<i64: 1>, scalar_prefetch = 0 : i64, scratch_operands = 0 : i64, tpu.core_type = #tpu.core_type<tc>, window_params = [{pipeline_mode = #tpu.pipeline_mode<synchronous>, transform_indices = @transform_0, window_bounds = array<i64: 2, 16, 16>}, {pipeline_mode = #tpu.pipeline_mode<synchronous>, transform_indices = @transform_1, window_bounds = array<i64: 2, 32, 32>}, {pipeline_mode = #tpu.pipeline_mode<synchronous>, transform_indices = @transform_2, window_bounds = array<i64: 2, 32, 32>}]} {
    %c0 = arith.constant 0 : index
    %c0_0 = arith.constant 0 : index
    %c0_1 = arith.constant 0 : index
    %0 = vector.load %arg1[%c0, %c0_0, %c0_1] : memref<2x16x16xf32, #tpu.memory_space<vmem>>, vector<2x16x16xf32>
    %cst = arith.constant 0.000000e+00 : f32
    %1 = vector.broadcast %cst : f32 to vector<2x32x32xf32>
    %c0_2 = arith.constant 0 : index
    %c0_3 = arith.constant 0 : index
    %c0_4 = arith.constant 0 : index
    %2 = vector.load %arg2[%c0_2, %c0_3, %c0_4] : memref<2x32x32xf32, #tpu.memory_space<vmem>>, vector<2x32x32xf32>
    tpu.vector_store %arg2[%c0_2, %c0_3, %c0_4], %1 {strides = array<i32>} : memref<2x32x32xf32, #tpu.memory_space<vmem>>, vector<2x32x32xf32>,
    %cst_5 = arith.constant 0.000000e+00 : f32
    %3 = vector.broadcast %cst_5 : f32 to vector<2x32x32xf32>
    %c0_6 = arith.constant 0 : index
    %c0_7 = arith.constant 0 : index
    %c0_8 = arith.constant 0 : index
    %4 = vector.load %arg3[%c0_6, %c0_7, %c0_8] : memref<2x32x32xf32, #tpu.memory_space<vmem>>, vector<2x32x32xf32>
    tpu.vector_store %arg3[%c0_6, %c0_7, %c0_8], %3 {strides = array<i32>} : memref<2x32x32xf32, #tpu.memory_space<vmem>>, vector<2x32x32xf32>,
    %5 = math.cos %0 : vector<2x16x16xf32>
    %c0_9 = arith.constant 0 : index
    %c0_10 = arith.constant 0 : index
    %c0_11 = arith.constant 0 : index
    %6 = vector.load %arg2[%c0_9, %c0_10, %c0_11] : memref<2x32x32xf32, #tpu.memory_space<vmem>>, vector<2x16x16xf32>
    tpu.vector_store %arg2[%c0_9, %c0_10, %c0_11], %5 {strides = array<i32>} : memref<2x32x32xf32, #tpu.memory_space<vmem>>, vector<2x16x16xf32>,
    %7 = math.sin %0 : vector<2x16x16xf32>
    %c0_12 = arith.constant 0 : index
    %c0_13 = arith.constant 0 : index
    %c0_14 = arith.constant 0 : index
    %8 = vector.load %arg3[%c0_12, %c0_13, %c0_14] : memref<2x32x32xf32, #tpu.memory_space<vmem>>, vector<2x16x16xf32>
    tpu.vector_store %arg3[%c0_12, %c0_13, %c0_14], %7 {strides = array<i32>} : memref<2x32x32xf32, #tpu.memory_space<vmem>>, vector<2x16x16xf32>,
    return
  }
  func.func @transform_0(%arg0: i32) -> (i32, i32, i32) {
    %c0_i32 = arith.constant 0 : i32
    %c0_i32_0 = arith.constant 0 : i32
    %c0_i32_1 = arith.constant 0 : i32
    %c0_i32_2 = arith.constant 0 : i32
    return %c0_i32, %c0_i32_0, %c0_i32_1 : i32, i32, i32
  }
  func.func @transform_1(%arg0: i32) -> (i32, i32, i32) {
    %c0_i32 = arith.constant 0 : i32
    %c0_i32_0 = arith.constant 0 : i32
    %c0_i32_1 = arith.constant 0 : i32
    %c0_i32_2 = arith.constant 0 : i32
    return %c0_i32, %c0_i32_0, %c0_i32_1 : i32, i32, i32
  }
  func.func @transform_2(%arg0: i32) -> (i32, i32, i32) {
    %c0_i32 = arith.constant 0 : i32
    %c0_i32_0 = arith.constant 0 : i32
    %c0_i32_1 = arith.constant 0 : i32
    %c0_i32_2 = arith.constant 0 : i32
    return %c0_i32, %c0_i32_0, %c0_i32_1 : i32, i32, i32
  }
}

module attributes {stable_mosaic.version = 11 : i64} {
  func.func @_cmul_kernel(%arg0: i32, %arg1: memref<1x1024xf32, #tpu.memory_space<vmem>>, %arg2: memref<1x1024xf32, #tpu.memory_space<vmem>>, %arg3: memref<2x1024xf32, #tpu.memory_space<vmem>>, %arg4: memref<2x1024xf32, #tpu.memory_space<vmem>>, %arg5: memref<2x1024xf32, #tpu.memory_space<vmem>>, %arg6: memref<2x1024xf32, #tpu.memory_space<vmem>>) attributes {dimension_semantics = [#tpu.dimension_semantics<arbitrary>], iteration_bounds = array<i64: 1>, scalar_prefetch = 0 : i64, scratch_operands = 0 : i64, tpu.core_type = #tpu.core_type<tc>, window_params = [{pipeline_mode = #tpu.pipeline_mode<synchronous>, transform_indices = @transform_0, window_bounds = array<i64: 1, 1024>}, {pipeline_mode = #tpu.pipeline_mode<synchronous>, transform_indices = @transform_1, window_bounds = array<i64: 1, 1024>}, {pipeline_mode = #tpu.pipeline_mode<synchronous>, transform_indices = @transform_2, window_bounds = array<i64: 2, 1024>}, {pipeline_mode = #tpu.pipeline_mode<synchronous>, transform_indices = @transform_3, window_bounds = array<i64: 2, 1024>}, {pipeline_mode = #tpu.pipeline_mode<synchronous>, transform_indices = @transform_4, window_bounds = array<i64: 2, 1024>}, {pipeline_mode = #tpu.pipeline_mode<synchronous>, transform_indices = @transform_5, window_bounds = array<i64: 2, 1024>}]} {
    %c0 = arith.constant 0 : index
    %c0_0 = arith.constant 0 : index
    %0 = vector.load %arg1[%c0, %c0_0] : memref<1x1024xf32, #tpu.memory_space<vmem>>, vector<1x1024xf32>
    %c0_1 = arith.constant 0 : index
    %c0_2 = arith.constant 0 : index
    %1 = vector.load %arg2[%c0_1, %c0_2] : memref<1x1024xf32, #tpu.memory_space<vmem>>, vector<1x1024xf32>
    %c0_3 = arith.constant 0 : index
    %c0_4 = arith.constant 0 : index
    %2 = vector.load %arg3[%c0_3, %c0_4] : memref<2x1024xf32, #tpu.memory_space<vmem>>, vector<2x1024xf32>
    %c0_5 = arith.constant 0 : index
    %c0_6 = arith.constant 0 : index
    %3 = vector.load %arg4[%c0_5, %c0_6] : memref<2x1024xf32, #tpu.memory_space<vmem>>, vector<2x1024xf32>
    %4 = vector.broadcast %0 : vector<1x1024xf32> to vector<2x1024xf32>
    %5 = arith.mulf %4, %2 : vector<2x1024xf32>
    %6 = vector.broadcast %1 : vector<1x1024xf32> to vector<2x1024xf32>
    %7 = arith.mulf %6, %3 : vector<2x1024xf32>
    %8 = arith.subf %5, %7 : vector<2x1024xf32>
    %c0_7 = arith.constant 0 : index
    %c0_8 = arith.constant 0 : index
    %9 = vector.load %arg5[%c0_7, %c0_8] : memref<2x1024xf32, #tpu.memory_space<vmem>>, vector<2x1024xf32>
    tpu.vector_store %arg5[%c0_7, %c0_8], %8 {strides = array<i32>} : memref<2x1024xf32, #tpu.memory_space<vmem>>, vector<2x1024xf32>,
    %10 = vector.broadcast %0 : vector<1x1024xf32> to vector<2x1024xf32>
    %11 = arith.mulf %10, %3 : vector<2x1024xf32>
    %12 = vector.broadcast %1 : vector<1x1024xf32> to vector<2x1024xf32>
    %13 = arith.mulf %12, %2 : vector<2x1024xf32>
    %14 = arith.addf %11, %13 : vector<2x1024xf32>
    %c0_9 = arith.constant 0 : index
    %c0_10 = arith.constant 0 : index
    %15 = vector.load %arg6[%c0_9, %c0_10] : memref<2x1024xf32, #tpu.memory_space<vmem>>, vector<2x1024xf32>
    tpu.vector_store %arg6[%c0_9, %c0_10], %14 {strides = array<i32>} : memref<2x1024xf32, #tpu.memory_space<vmem>>, vector<2x1024xf32>,
    return
  }
  func.func @transform_0(%arg0: i32) -> (i32, i32) {
    %c0_i32 = arith.constant 0 : i32
    %c0_i32_0 = arith.constant 0 : i32
    %c0_i32_1 = arith.constant 0 : i32
    return %c0_i32, %c0_i32_0 : i32, i32
  }
  func.func @transform_1(%arg0: i32) -> (i32, i32) {
    %c0_i32 = arith.constant 0 : i32
    %c0_i32_0 = arith.constant 0 : i32
    %c0_i32_1 = arith.constant 0 : i32
    return %c0_i32, %c0_i32_0 : i32, i32
  }
  func.func @transform_2(%arg0: i32) -> (i32, i32) {
    %c0_i32 = arith.constant 0 : i32
    %c0_i32_0 = arith.constant 0 : i32
    %c0_i32_1 = arith.constant 0 : i32
    return %c0_i32, %c0_i32_0 : i32, i32
  }
  func.func @transform_3(%arg0: i32) -> (i32, i32) {
    %c0_i32 = arith.constant 0 : i32
    %c0_i32_0 = arith.constant 0 : i32
    %c0_i32_1 = arith.constant 0 : i32
    return %c0_i32, %c0_i32_0 : i32, i32
  }
  func.func @transform_4(%arg0: i32) -> (i32, i32) {
    %c0_i32 = arith.constant 0 : i32
    %c0_i32_0 = arith.constant 0 : i32
    %c0_i32_1 = arith.constant 0 : i32
    return %c0_i32, %c0_i32_0 : i32, i32
  }
  func.func @transform_5(%arg0: i32) -> (i32, i32) {
    %c0_i32 = arith.constant 0 : i32
    %c0_i32_0 = arith.constant 0 : i32
    %c0_i32_1 = arith.constant 0 : i32
    return %c0_i32, %c0_i32_0 : i32, i32
  }
}

module attributes {stable_mosaic.version = 11 : i64} {
  func.func @_crop_intensity_kernel(%arg0: i32, %arg1: memref<2x16x32xf32, #tpu.memory_space<vmem>>, %arg2: memref<2x16x32xf32, #tpu.memory_space<vmem>>, %arg3: memref<2x16x16xf32, #tpu.memory_space<vmem>>) attributes {dimension_semantics = [#tpu.dimension_semantics<arbitrary>], iteration_bounds = array<i64: 1>, scalar_prefetch = 0 : i64, scratch_operands = 0 : i64, tpu.core_type = #tpu.core_type<tc>, window_params = [{transform_indices = @transform_0, window_bounds = array<i64: 2, 16, 32>}, {transform_indices = @transform_1, window_bounds = array<i64: 2, 16, 32>}, {pipeline_mode = #tpu.pipeline_mode<synchronous>, transform_indices = @transform_2, window_bounds = array<i64: 2, 16, 16>}]} {
    %c0 = arith.constant 0 : index
    %c0_0 = arith.constant 0 : index
    %c0_1 = arith.constant 0 : index
    %0 = vector.load %arg1[%c0, %c0_0, %c0_1] : memref<2x16x32xf32, #tpu.memory_space<vmem>>, vector<2x16x16xf32>
    %c0_2 = arith.constant 0 : index
    %c0_3 = arith.constant 0 : index
    %c0_4 = arith.constant 0 : index
    %1 = vector.load %arg2[%c0_2, %c0_3, %c0_4] : memref<2x16x32xf32, #tpu.memory_space<vmem>>, vector<2x16x16xf32>
    %2 = arith.mulf %0, %0 : vector<2x16x16xf32>
    %3 = arith.mulf %1, %1 : vector<2x16x16xf32>
    %4 = arith.addf %2, %3 : vector<2x16x16xf32>
    %cst = arith.constant 0.949999988 : f32
    %5 = vector.broadcast %cst : f32 to vector<2x16x16xf32>
    %6 = arith.mulf %4, %5 : vector<2x16x16xf32>
    %7 = math.sqrt %6 : vector<2x16x16xf32>
    %c0_5 = arith.constant 0 : index
    %c0_6 = arith.constant 0 : index
    %c0_7 = arith.constant 0 : index
    %8 = vector.load %arg3[%c0_5, %c0_6, %c0_7] : memref<2x16x16xf32, #tpu.memory_space<vmem>>, vector<2x16x16xf32>
    tpu.vector_store %arg3[%c0_5, %c0_6, %c0_7], %7 {strides = array<i32>} : memref<2x16x16xf32, #tpu.memory_space<vmem>>, vector<2x16x16xf32>,
    return
  }
  func.func @transform_0(%arg0: i32) -> (i32, i32, i32) {
    %c0_i32 = arith.constant 0 : i32
    %c0_i32_0 = arith.constant 0 : i32
    %c0_i32_1 = arith.constant 0 : i32
    %c0_i32_2 = arith.constant 0 : i32
    return %c0_i32, %c0_i32_0, %c0_i32_1 : i32, i32, i32
  }
  func.func @transform_1(%arg0: i32) -> (i32, i32, i32) {
    %c0_i32 = arith.constant 0 : i32
    %c0_i32_0 = arith.constant 0 : i32
    %c0_i32_1 = arith.constant 0 : i32
    %c0_i32_2 = arith.constant 0 : i32
    return %c0_i32, %c0_i32_0, %c0_i32_1 : i32, i32, i32
  }
  func.func @transform_2(%arg0: i32) -> (i32, i32, i32) {
    %c0_i32 = arith.constant 0 : i32
    %c0_i32_0 = arith.constant 0 : i32
    %c0_i32_1 = arith.constant 0 : i32
    %c0_i32_2 = arith.constant 0 : i32
    return %c0_i32, %c0_i32_0, %c0_i32_1 : i32, i32, i32
  }
}

</mosaic_0001>

<llo_original>
// kernel: forward.5
$region0: #{forward.5}
  #allocation0 [shape = 'u32[]', space=smem, size = 0x4, offset = 0x4, fixed_abs, tag = 'smem constant byte address 0x4 - core index']
  #allocation1 [shape = 'u32[144,128]{1,0:T(1,128)}', space=vmem, size = 0x12000, scoped, tag = 'internal scratch']
  %s0 = inlined_call_operand.vmem [shape: f32[2,16,16], index: 0, kind: input, shape index: {}]
  %s1 = inlined_call_operand.vmem [shape: f32[2,32,32], index: 1, kind: output, shape index: {0}]
  %s2 = inlined_call_operand.vmem [shape: f32[2,32,32], index: 2, kind: output, shape index: {1}]
  %3 = xla_tuple %s1, %s2
  %s4 = sld [smem:[#allocation0]]
  $region22: #{forward.5} parent=0
    _
  %s6 = ssub.s32 1, %s4
  %s7 = scalar_select 0, %s6, %s4
  // Predicated region
  $region2: #{forward.5} parent=0 // pred_check
    _
  $region3: #{forward.5} parent=0 // pred_check_branch
    %9 = sbr.rel (0) target = $region5
  $region4: #{forward.5} parent=0 // pred_region
    _
  $region5: #{forward.5} parent=0 // pred_fallthru
    _
  %v10 = vld [vmem:[%s0] sm:$0xff]
  %v11 = vld [vmem:[%s0 + $0x8] sm:$0xff]
  %v12 = vld [vmem:[%s0 + $0x10] sm:$0xff]
  %v13 = vld [vmem:[%s0 + $0x18] sm:$0xff]
  %vm14 = vcmask 261120
  %15 = vst.msk [vmem:[%s1] sm:$0xff] %vm14, 0.0
  %16 = vst.msk [vmem:[%s1 + $0x8] sm:$0xff] %vm14, 0.0
  %17 = vst.msk [vmem:[%s1 + $0x10] sm:$0xff] %vm14, 0.0
  %18 = vst.msk [vmem:[%s1 + $0x18] sm:$0xff] %vm14, 0.0
  %19 = vst.msk [vmem:[%s1 + $0x20] sm:$0xff] %vm14, 0.0
  %20 = vst.msk [vmem:[%s1 + $0x28] sm:$0xff] %vm14, 0.0
  %21 = vst.msk [vmem:[%s1 + $0x30] sm:$0xff] %vm14, 0.0
  %22 = vst.msk [vmem:[%s1 + $0x38] sm:$0xff] %vm14, 0.0
  %23 = vst.msk [vmem:[%s2] sm:$0xff] %vm14, 0.0
  %24 = vst.msk [vmem:[%s2 + $0x8] sm:$0xff] %vm14, 0.0
  %25 = vst.msk [vmem:[%s2 + $0x10] sm:$0xff] %vm14, 0.0
  %26 = vst.msk [vmem:[%s2 + $0x18] sm:$0xff] %vm14, 0.0
  %27 = vst.msk [vmem:[%s2 + $0x20] sm:$0xff] %vm14, 0.0
  %28 = vst.msk [vmem:[%s2 + $0x28] sm:$0xff] %vm14, 0.0
  %29 = vst.msk [vmem:[%s2 + $0x30] sm:$0xff] %vm14, 0.0
  %30 = vst.msk [vmem:[%s2 + $0x38] sm:$0xff] %vm14, 0.0
  %v31 = vand.u32 2147483647, %v10
  %vm32 = vcmp.le.f32.partialorder %v31, 0.7853982
  %vm33 = vcmp.lt.s32.totalorder %v10, 0
  %v34 = vand.u32 %v10, 2139095040
  %v35 = vshrl.u32 %v34, 23
  %v36 = vsub.s32 %v35, 127
  %v37 = vand.u32 2147483647, %v10
  %v38 = vand.u32 %v37, 8388607
  %v39 = vor.u32 %v38, 8388608
  %v40 = vsub.s32 0, %v39
  %v41 = vadd.s32 %v36, 1
  %vm42 = vcmp.gt.s32.totalorder %v41, 0
  %v43 = vsel %vm42, %v41, 0
  %v44 = vshrl.u32 %v43, 5
  %v45 = vand.u32 %v43, 31
  %v46 = vsub.s32 32, %v45
  %v47 = vshrl.u32 683565275, %v46
  %v48 = vshll.u32 683565275, %v45
  %v49 = vshrl.u32 2475754826, %v46
  %v50 = vor.u32 %v48, %v49
  %v51 = vshll.u32 2475754826, %v45
  %v52 = vshrl.u32 2131351028, %v46
  %v53 = vor.u32 %v51, %v52
  %v54 = vshll.u32 2131351028, %v45
  %v55 = vshrl.u32 2102212464, %v46
  %v56 = vor.u32 %v54, %v55
  %v57 = vshll.u32 2102212464, %v45
  %v58 = vshrl.u32 920167782, %v46
  %v59 = vor.u32 %v57, %v58
  %v60 = vshll.u32 920167782, %v45
  %v61 = vshrl.u32 1326507024, %v46
  %v62 = vor.u32 %v60, %v61
  %vm63 = vcmp.lt.s32.totalorder %v44, 1
  %vm64 = vcmp.lt.s32.totalorder %v44, 2
  %vm65 = vcmp.lt.s32.totalorder %v44, 3
  %vm66 = vcmp.lt.s32.totalorder %v44, 4
  %v67 = vsel %vm63, %v47, %v50
  %v68 = vsel %vm66, %v56, 2102212464
  %v69 = vsel %vm65, %v53, %v68
  %v70 = vsel %vm64, %v67, %v69
  %v71 = vsel %vm63, %v50, %v53
  %v72 = vsel %vm66, %v59, 920167782
  %v73 = vsel %vm65, %v56, %v72
  %v74 = vsel %vm64, %v71, %v73
  %v75 = vsel %vm63, %v53, %v56
  %v76 = vsel %vm66, %v62, 1326507024
  %v77 = vsel %vm65, %v59, %v76
  %v78 = vsel %vm64, %v75, %v77
  %v79 = vshll.u32 %v39, 8
  %v80 = vmul.u32.u64.compose %v79, %v78
  %v81 = vextract.low.u32 %v80
  %v82 = vextract.high.u32 %v80
  %v83 = vmul.u32.u64.compose %v79, %v74
  %v84 = vextract.low.u32 %v83
  %v85 = vextract.high.u32 %v83
  %v86 = vmul.u32 %v79, %v70
  %v87 = vadd.s32 %v82, %v84
  %vm88 = vc.u32 %v82, %v84
  %v89 = vadd.s32 %v85, 1
  %v90 = vsel %vm88, %v89, %v85
  %v91 = vadd.s32 %v86, %v90
  %v92 = vadd.s32 %v91, 536870912
  %v93 = vshrl.u32 %v92, 30
  %v94 = vshll.u32 %v93, 30
  %v95 = vsub.s32 %v91, %v94
  %vm96 = vcmp.lt.s32.totalorder %v95, 0
  %v97 = vsub.s32 0, %v95
  %v98 = vsel %vm96, %v97, %v95
  %v99 = vclz %v98
  %v100 = vsub.s32 %v99, 2
  %vm101 = vcmp.gt.s32.totalorder 0, %v100
  %v102 = vsel %vm101, 0, %v100
  %v103 = vsub.s32 32, %v102
  %v104 = vshll.u32 %v95, %v102
  %v105 = vshrl.u32 %v87, %v103
  %v106 = vor.u32 %v104, %v105
  %v107 = vsub.s32 4294967266, %v102
  %v108 = vadd.s32 %v107, 127
  %v109 = vshll.u32 %v108, 23
  %v110 = vor.u32 4788187, %v109
  %v111 = vand.u32 2147483647, %v110
  %v113 = vcvt.s32.f32 %v106
  %v114 = vmul.f32 %v113, %v111
  %v115 = vxor.u32 %v114, 2147483648
  %v116 = vsel %vm33, %v115, %v114
  %v117 = vsub.s32 4, %v93
  %v118 = vsel %vm33, %v117, %v93
  %v119 = vsel %vm32, %v10, %v116
  %v120 = vsel %vm32, 0, %v118
  %v121 = vcosq.f32.pop %v119
  %v122 = vsinq.f32.pop %v119
  %vm123 = vweird.f32 %v10
  %v124 = vand.u32 %v120, 3
  %vm125 = vcmp.lt.s32.totalorder %v124, 2
  %vm126 = vcmp.eq.s32.totalorder %v124, 0
  %v127 = vxor.u32 %v122, 2147483648
  %v128 = vsel %vm126, %v121, %v127
  %vm129 = vcmp.eq.s32.totalorder %v124, 2
  %v130 = vxor.u32 %v121, 2147483648
  %v131 = vsel %vm129, %v130, %v122
  %v132 = vsel %vm125, %v128, %v131
  %v133 = vsel %vm123, nan, %v132
  %v134 = vand.u32 2147483647, %v11
  %vm135 = vcmp.le.f32.partialorder %v134, 0.7853982
  %vm136 = vcmp.lt.s32.totalorder %v11, 0
  %v137 = vand.u32 %v11, 2139095040
  %v138 = vshrl.u32 %v137, 23
  %v139 = vsub.s32 %v138, 127
  %v140 = vand.u32 2147483647, %v11
  %v141 = vand.u32 %v140, 8388607
  %v142 = vor.u32 %v141, 8388608
  %v143 = vsub.s32 0, %v142
  %v144 = vadd.s32 %v139, 1
  %vm145 = vcmp.gt.s32.totalorder %v144, 0
  %v146 = vsel %vm145, %v144, 0
  %v147 = vshrl.u32 %v146, 5
  %v148 = vand.u32 %v146, 31
  %v149 = vsub.s32 32, %v148
  %v150 = vshrl.u32 683565275, %v149
  %v151 = vshll.u32 683565275, %v148
  %v152 = vshrl.u32 2475754826, %v149
  %v153 = vor.u32 %v151, %v152
  %v154 = vshll.u32 2475754826, %v148
  %v155 = vshrl.u32 2131351028, %v149
  %v156 = vor.u32 %v154, %v155
  %v157 = vshll.u32 2131351028, %v148
  %v158 = vshrl.u32 2102212464, %v149
  %v159 = vor.u32 %v157, %v158
  %v160 = vshll.u32 2102212464, %v148
  %v161 = vshrl.u32 920167782, %v149
  %v162 = vor.u32 %v160, %v161
  %v163 = vshll.u32 920167782, %v148
  %v164 = vshrl.u32 1326507024, %v149
  %v165 = vor.u32 %v163, %v164
  %vm166 = vcmp.lt.s32.totalorder %v147, 1
  %vm167 = vcmp.lt.s32.totalorder %v147, 2
  %vm168 = vcmp.lt.s32.totalorder %v147, 3
  %vm169 = vcmp.lt.s32.totalorder %v147, 4
  %v170 = vsel %vm166, %v150, %v153
  %v171 = vsel %vm169, %v159, 2102212464
  %v172 = vsel %vm168, %v156, %v171
  %v173 = vsel %vm167, %v170, %v172
  %v174 = vsel %vm166, %v153, %v156
  %v175 = vsel %vm169, %v162, 920167782
  %v176 = vsel %vm168, %v159, %v175
  %v177 = vsel %vm167, %v174, %v176
  %v178 = vsel %vm166, %v156, %v159
  %v179 = vsel %vm169, %v165, 1326507024
  %v180 = vsel %vm168, %v162, %v179
  %v181 = vsel %vm167, %v178, %v180
  %v182 = vshll.u32 %v142, 8
  %v183 = vmul.u32.u64.compose %v182, %v181
  %v184 = vextract.low.u32 %v183
  %v185 = vextract.high.u32 %v183
  %v186 = vmul.u32.u64.compose %v182, %v177
  %v187 = vextract.low.u32 %v186
  %v188 = vextract.high.u32 %v186
  %v189 = vmul.u32 %v182, %v173
  %v190 = vadd.s32 %v185, %v187
  %vm191 = vc.u32 %v185, %v187
  %v192 = vadd.s32 %v188, 1
  %v193 = vsel %vm191, %v192, %v188
  %v194 = vadd.s32 %v189, %v193
  %v195 = vadd.s32 %v194, 536870912
  %v196 = vshrl.u32 %v195, 30
  %v197 = vshll.u32 %v196, 30
  %v198 = vsub.s32 %v194, %v197
  %vm199 = vcmp.lt.s32.totalorder %v198, 0
  %v200 = vsub.s32 0, %v198
  %v201 = vsel %vm199, %v200, %v198
  %v202 = vclz %v201
  %v203 = vsub.s32 %v202, 2
  %vm204 = vcmp.gt.s32.totalorder 0, %v203
  %v205 = vsel %vm204, 0, %v203
  %v206 = vsub.s32 32, %v205
  %v207 = vshll.u32 %v198, %v205
  %v208 = vshrl.u32 %v190, %v206
  %v209 = vor.u32 %v207, %v208
  %v210 = vsub.s32 4294967266, %v205
  %v211 = vadd.s32 %v210, 127
  %v212 = vshll.u32 %v211, 23
  %v213 = vor.u32 4788187, %v212
  %v214 = vand.u32 2147483647, %v213
  %v216 = vcvt.s32.f32 %v209
  %v217 = vmul.f32 %v216, %v214
  %v218 = vxor.u32 %v217, 2147483648
  %v219 = vsel %vm136, %v218, %v217
  %v220 = vsub.s32 4, %v196
  %v221 = vsel %vm136, %v220, %v196
  %v222 = vsel %vm135, %v11, %v219
  %v223 = vsel %vm135, 0, %v221
  %v224 = vcosq.f32.pop %v222
  %v225 = vsinq.f32.pop %v222
  %vm226 = vweird.f32 %v11
  %v227 = vand.u32 %v223, 3
  %vm228 = vcmp.lt.s32.totalorder %v227, 2
  %vm229 = vcmp.eq.s32.totalorder %v227, 0
  %v230 = vxor.u32 %v225, 2147483648
  %v231 = vsel %vm229, %v224, %v230
  %vm232 = vcmp.eq.s32.totalorder %v227, 2
  %v233 = vxor.u32 %v224, 2147483648
  %v234 = vsel %vm232, %v233, %v225
  %v235 = vsel %vm228, %v231, %v234
  %v236 = vsel %vm226, nan, %v235
  %v237 = vand.u32 2147483647, %v12
  %vm238 = vcmp.le.f32.partialorder %v237, 0.7853982
  %vm239 = vcmp.lt.s32.totalorder %v12, 0
  %v240 = vand.u32 %v12, 2139095040
  %v241 = vshrl.u32 %v240, 23
  %v242 = vsub.s32 %v241, 127
  %v243 = vand.u32 2147483647, %v12
  %v244 = vand.u32 %v243, 8388607
  %v245 = vor.u32 %v244, 8388608
  %v246 = vsub.s32 0, %v245
  %v247 = vadd.s32 %v242, 1
  %vm248 = vcmp.gt.s32.totalorder %v247, 0
  %v249 = vsel %vm248, %v247, 0
  %v250 = vshrl.u32 %v249, 5
  %v251 = vand.u32 %v249, 31
  %v252 = vsub.s32 32, %v251
  %v253 = vshrl.u32 683565275, %v252
  %v254 = vshll.u32 683565275, %v251
  %v255 = vshrl.u32 2475754826, %v252
  %v256 = vor.u32 %v254, %v255
  %v257 = vshll.u32 2475754826, %v251
  %v258 = vshrl.u32 2131351028, %v252
  %v259 = vor.u32 %v257, %v258
  %v260 = vshll.u32 2131351028, %v251
  %v261 = vshrl.u32 2102212464, %v252
  %v262 = vor.u32 %v260, %v261
  %v263 = vshll.u32 2102212464, %v251
  %v264 = vshrl.u32 920167782, %v252
  %v265 = vor.u32 %v263, %v264
  %v266 = vshll.u32 920167782, %v251
  %v267 = vshrl.u32 1326507024, %v252
  %v268 = vor.u32 %v266, %v267
  %vm269 = vcmp.lt.s32.totalorder %v250, 1
  %vm270 = vcmp.lt.s32.totalorder %v250, 2
  %vm271 = vcmp.lt.s32.totalorder %v250, 3
  %vm272 = vcmp.lt.s32.totalorder %v250, 4
  %v273 = vsel %vm269, %v253, %v256
  %v274 = vsel %vm272, %v262, 2102212464
  %v275 = vsel %vm271, %v259, %v274
  %v276 = vsel %vm270, %v273, %v275
  %v277 = vsel %vm269, %v256, %v259
  %v278 = vsel %vm272, %v265, 920167782
  %v279 = vsel %vm271, %v262, %v278
  %v280 = vsel %vm270, %v277, %v279
  %v281 = vsel %vm269, %v259, %v262
  %v282 = vsel %vm272, %v268, 1326507024
  %v283 = vsel %vm271, %v265, %v282
  %v284 = vsel %vm270, %v281, %v283
  %v285 = vshll.u32 %v245, 8
  %v286 = vmul.u32.u64.compose %v285, %v284
  %v287 = vextract.low.u32 %v286
  %v288 = vextract.high.u32 %v286
  %v289 = vmul.u32.u64.compose %v285, %v280
  %v290 = vextract.low.u32 %v289
  %v291 = vextract.high.u32 %v289
  %v292 = vmul.u32 %v285, %v276
  %v293 = vadd.s32 %v288, %v290
  %vm294 = vc.u32 %v288, %v290
  %v295 = vadd.s32 %v291, 1
  %v296 = vsel %vm294, %v295, %v291
  %v297 = vadd.s32 %v292, %v296
  %v298 = vadd.s32 %v297, 536870912
  %v299 = vshrl.u32 %v298, 30
  %v300 = vshll.u32 %v299, 30
  %v301 = vsub.s32 %v297, %v300
  %vm302 = vcmp.lt.s32.totalorder %v301, 0
  %v303 = vsub.s32 0, %v301
  %v304 = vsel %vm302, %v303, %v301
  %v305 = vclz %v304
  %v306 = vsub.s32 %v305, 2
  %vm307 = vcmp.gt.s32.totalorder 0, %v306
  %v308 = vsel %vm307, 0, %v306
  %v309 = vsub.s32 32, %v308
  %v310 = vshll.u32 %v301, %v308
  %v311 = vshrl.u32 %v293, %v309
  %v312 = vor.u32 %v310, %v311
  %v313 = vsub.s32 4294967266, %v308
  %v314 = vadd.s32 %v313, 127
  %v315 = vshll.u32 %v314, 23
  %v316 = vor.u32 4788187, %v315
  %v317 = vand.u32 2147483647, %v316
  %v319 = vcvt.s32.f32 %v312
  %v320 = vmul.f32 %v319, %v317
  %v321 = vxor.u32 %v320, 2147483648
  %v322 = vsel %vm239, %v321, %v320
  %v323 = vsub.s32 4, %v299
  %v324 = vsel %vm239, %v323, %v299
  %v325 = vsel %vm238, %v12, %v322
  %v326 = vsel %vm238, 0, %v324
  %v327 = vcosq.f32.pop %v325
  %v328 = vsinq.f32.pop %v325
  %vm329 = vweird.f32 %v12
  %v330 = vand.u32 %v326, 3
  %vm331 = vcmp.lt.s32.totalorder %v330, 2
  %vm332 = vcmp.eq.s32.totalorder %v330, 0
  %v333 = vxor.u32 %v328, 2147483648
  %v334 = vsel %vm332, %v327, %v333
  %vm335 = vcmp.eq.s32.totalorder %v330, 2
  %v336 = vxor.u32 %v327, 2147483648
  %v337 = vsel %vm335, %v336, %v328
  %v338 = vsel %vm331, %v334, %v337
  %v339 = vsel %vm329, nan, %v338
  %v340 = vand.u32 2147483647, %v13
  %vm341 = vcmp.le.f32.partialorder %v340, 0.7853982
  %vm342 = vcmp.lt.s32.totalorder %v13, 0
  %v343 = vand.u32 %v13, 2139095040
  %v344 = vshrl.u32 %v343, 23
  %v345 = vsub.s32 %v344, 127
  %v346 = vand.u32 2147483647, %v13
  %v347 = vand.u32 %v346, 8388607
  %v348 = vor.u32 %v347, 8388608
  %v349 = vsub.s32 0, %v348
  %v350 = vadd.s32 %v345, 1
  %vm351 = vcmp.gt.s32.totalorder %v350, 0
  %v352 = vsel %vm351, %v350, 0
  %v353 = vshrl.u32 %v352, 5
  %v354 = vand.u32 %v352, 31
  %v355 = vsub.s32 32, %v354
  %v356 = vshrl.u32 683565275, %v355
  %v357 = vshll.u32 683565275, %v354
  %v358 = vshrl.u32 2475754826, %v355
  %v359 = vor.u32 %v357, %v358
  %v360 = vshll.u32 2475754826, %v354
  %v361 = vshrl.u32 2131351028, %v355
  %v362 = vor.u32 %v360, %v361
  %v363 = vshll.u32 2131351028, %v354
  %v364 = vshrl.u32 2102212464, %v355
  %v365 = vor.u32 %v363, %v364
  %v366 = vshll.u32 2102212464, %v354
  %v367 = vshrl.u32 920167782, %v355
  %v368 = vor.u32 %v366, %v367
  %v369 = vshll.u32 920167782, %v354
  %v370 = vshrl.u32 1326507024, %v355
  %v371 = vor.u32 %v369, %v370
  %vm372 = vcmp.lt.s32.totalorder %v353, 1
  %vm373 = vcmp.lt.s32.totalorder %v353, 2
  %vm374 = vcmp.lt.s32.totalorder %v353, 3
  %vm375 = vcmp.lt.s32.totalorder %v353, 4
  %v376 = vsel %vm372, %v356, %v359
  %v377 = vsel %vm375, %v365, 2102212464
  %v378 = vsel %vm374, %v362, %v377
  %v379 = vsel %vm373, %v376, %v378
  %v380 = vsel %vm372, %v359, %v362
  %v381 = vsel %vm375, %v368, 920167782
  %v382 = vsel %vm374, %v365, %v381
  %v383 = vsel %vm373, %v380, %v382
  %v384 = vsel %vm372, %v362, %v365
  %v385 = vsel %vm375, %v371, 1326507024
  %v386 = vsel %vm374, %v368, %v385
  %v387 = vsel %vm373, %v384, %v386
  %v388 = vshll.u32 %v348, 8
  %v389 = vmul.u32.u64.compose %v388, %v387
  %v390 = vextract.low.u32 %v389
  %v391 = vextract.high.u32 %v389
  %v392 = vmul.u32.u64.compose %v388, %v383
  %v393 = vextract.low.u32 %v392
  %v394 = vextract.high.u32 %v392
  %v395 = vmul.u32 %v388, %v379
  %v396 = vadd.s32 %v391, %v393
  %vm397 = vc.u32 %v391, %v393
  %v398 = vadd.s32 %v394, 1
  %v399 = vsel %vm397, %v398, %v394
  %v400 = vadd.s32 %v395, %v399
  %v401 = vadd.s32 %v400, 536870912
  %v402 = vshrl.u32 %v401, 30
  %v403 = vshll.u32 %v402, 30
  %v404 = vsub.s32 %v400, %v403
  %vm405 = vcmp.lt.s32.totalorder %v404, 0
  %v406 = vsub.s32 0, %v404
  %v407 = vsel %vm405, %v406, %v404
  %v408 = vclz %v407
  %v409 = vsub.s32 %v408, 2
  %vm410 = vcmp.gt.s32.totalorder 0, %v409
  %v411 = vsel %vm410, 0, %v409
  %v412 = vsub.s32 32, %v411
  %v413 = vshll.u32 %v404, %v411
  %v414 = vshrl.u32 %v396, %v412
  %v415 = vor.u32 %v413, %v414
  %v416 = vsub.s32 4294967266, %v411
  %v417 = vadd.s32 %v416, 127
  %v418 = vshll.u32 %v417, 23
  %v419 = vor.u32 4788187, %v418
  %v420 = vand.u32 2147483647, %v419
  %v422 = vcvt.s32.f32 %v415
  %v423 = vmul.f32 %v422, %v420
  %v424 = vxor.u32 %v423, 2147483648
  %v425 = vsel %vm342, %v424, %v423
  %v426 = vsub.s32 4, %v402
  %v427 = vsel %vm342, %v426, %v402
  %v428 = vsel %vm341, %v13, %v425
  %v429 = vsel %vm341, 0, %v427
  %v430 = vcosq.f32.pop %v428
  %v431 = vsinq.f32.pop %v428
  %vm432 = vweird.f32 %v13
  %v433 = vand.u32 %v429, 3
  %vm434 = vcmp.lt.s32.totalorder %v433, 2
  %vm435 = vcmp.eq.s32.totalorder %v433, 0
  %v436 = vxor.u32 %v431, 2147483648
  %v437 = vsel %vm435, %v430, %v436
  %vm438 = vcmp.eq.s32.totalorder %v433, 2
  %v439 = vxor.u32 %v430, 2147483648
  %v440 = vsel %vm438, %v439, %v431
  %v441 = vsel %vm434, %v437, %v440
  %v442 = vsel %vm432, nan, %v441
  %vm443 = vcmask 130048
  %444 = vst.msk [vmem:[%s1] sm:$0xff] %vm443, %v133
  %445 = vst.msk [vmem:[%s1 + $0x8] sm:$0xff] %vm443, %v236
  %446 = vst.msk [vmem:[%s1 + $0x20] sm:$0xff] %vm443, %v339
  %447 = vst.msk [vmem:[%s1 + $0x28] sm:$0xff] %vm443, %v442
  %v448 = vand.u32 2147483647, %v10
  %vm449 = vcmp.le.f32.partialorder %v448, 0.7853982
  %vm450 = vcmp.lt.s32.totalorder %v10, 0
  %v451 = vand.u32 %v10, 2139095040
  %v452 = vshrl.u32 %v451, 23
  %v453 = vsub.s32 %v452, 127
  %v454 = vand.u32 2147483647, %v10
  %v455 = vand.u32 %v454, 8388607
  %v456 = vor.u32 %v455, 8388608
  %v457 = vsub.s32 0, %v456
  %v458 = vadd.s32 %v453, 1
  %vm459 = vcmp.gt.s32.totalorder %v458, 0
  %v460 = vsel %vm459, %v458, 0
  %v461 = vshrl.u32 %v460, 5
  %v462 = vand.u32 %v460, 31
  %v463 = vsub.s32 32, %v462
  %v464 = vshrl.u32 683565275, %v463
  %v465 = vshll.u32 683565275, %v462
  %v466 = vshrl.u32 2475754826, %v463
  %v467 = vor.u32 %v465, %v466
  %v468 = vshll.u32 2475754826, %v462
  %v469 = vshrl.u32 2131351028, %v463
  %v470 = vor.u32 %v468, %v469
  %v471 = vshll.u32 2131351028, %v462
  %v472 = vshrl.u32 2102212464, %v463
  %v473 = vor.u32 %v471, %v472
  %v474 = vshll.u32 2102212464, %v462
  %v475 = vshrl.u32 920167782, %v463
  %v476 = vor.u32 %v474, %v475
  %v477 = vshll.u32 920167782, %v462
  %v478 = vshrl.u32 1326507024, %v463
  %v479 = vor.u32 %v477, %v478
  %vm480 = vcmp.lt.s32.totalorder %v461, 1
  %vm481 = vcmp.lt.s32.totalorder %v461, 2
  %vm482 = vcmp.lt.s32.totalorder %v461, 3
  %vm483 = vcmp.lt.s32.totalorder %v461, 4
  %v484 = vsel %vm480, %v464, %v467
  %v485 = vsel %vm483, %v473, 2102212464
  %v486 = vsel %vm482, %v470, %v485
  %v487 = vsel %vm481, %v484, %v486
  %v488 = vsel %vm480, %v467, %v470
  %v489 = vsel %vm483, %v476, 920167782
  %v490 = vsel %vm482, %v473, %v489
  %v491 = vsel %vm481, %v488, %v490
  %v492 = vsel %vm480, %v470, %v473
  %v493 = vsel %vm483, %v479, 1326507024
  %v494 = vsel %vm482, %v476, %v493
  %v495 = vsel %vm481, %v492, %v494
  %v496 = vshll.u32 %v456, 8
  %v497 = vmul.u32.u64.compose %v496, %v495
  %v498 = vextract.low.u32 %v497
  %v499 = vextract.high.u32 %v497
  %v500 = vmul.u32.u64.compose %v496, %v491
  %v501 = vextract.low.u32 %v500
  %v502 = vextract.high.u32 %v500
  %v503 = vmul.u32 %v496, %v487
  %v504 = vadd.s32 %v499, %v501
  %vm505 = vc.u32 %v499, %v501
  %v506 = vadd.s32 %v502, 1
  %v507 = vsel %vm505, %v506, %v502
  %v508 = vadd.s32 %v503, %v507
  %v509 = vadd.s32 %v508, 536870912
  %v510 = vshrl.u32 %v509, 30
  %v511 = vshll.u32 %v510, 30
  %v512 = vsub.s32 %v508, %v511
  %vm513 = vcmp.lt.s32.totalorder %v512, 0
  %v514 = vsub.s32 0, %v512
  %v515 = vsel %vm513, %v514, %v512
  %v516 = vclz %v515
  %v517 = vsub.s32 %v516, 2
  %vm518 = vcmp.gt.s32.totalorder 0, %v517
  %v519 = vsel %vm518, 0, %v517
  %v520 = vsub.s32 32, %v519
  %v521 = vshll.u32 %v512, %v519
  %v522 = vshrl.u32 %v504, %v520
  %v523 = vor.u32 %v521, %v522
  %v524 = vsub.s32 4294967266, %v519
  %v525 = vadd.s32 %v524, 127
  %v526 = vshll.u32 %v525, 23
  %v527 = vor.u32 4788187, %v526
  %v528 = vand.u32 2147483647, %v527
  %v530 = vcvt.s32.f32 %v523
  %v531 = vmul.f32 %v530, %v528
  %v532 = vxor.u32 %v531, 2147483648
  %v533 = vsel %vm450, %v532, %v531
  %v534 = vsub.s32 4, %v510
  %v535 = vsel %vm450, %v534, %v510
  %v536 = vsel %vm449, %v10, %v533
  %v537 = vsel %vm449, 0, %v535
  %v538 = vcosq.f32.pop %v536
  %v539 = vsinq.f32.pop %v536
  %vm540 = vweird.f32 %v10
  %v541 = vadd.s32 %v537, 3
  %v542 = vand.u32 %v541, 3
  %vm543 = vcmp.lt.s32.totalorder %v542, 2
  %vm544 = vcmp.eq.s32.totalorder %v542, 0
  %v545 = vxor.u32 %v539, 2147483648
  %v546 = vsel %vm544, %v538, %v545
  %vm547 = vcmp.eq.s32.totalorder %v542, 2
  %v548 = vxor.u32 %v538, 2147483648
  %v549 = vsel %vm547, %v548, %v539
  %v550 = vsel %vm543, %v546, %v549
  %v551 = vsel %vm540, nan, %v550
  %v552 = vand.u32 2147483647, %v11
  %vm553 = vcmp.le.f32.partialorder %v552, 0.7853982
  %vm554 = vcmp.lt.s32.totalorder %v11, 0
  %v555 = vand.u32 %v11, 2139095040
  %v556 = vshrl.u32 %v555, 23
  %v557 = vsub.s32 %v556, 127
  %v558 = vand.u32 2147483647, %v11
  %v559 = vand.u32 %v558, 8388607
  %v560 = vor.u32 %v559, 8388608
  %v561 = vsub.s32 0, %v560
  %v562 = vadd.s32 %v557, 1
  %vm563 = vcmp.gt.s32.totalorder %v562, 0
  %v564 = vsel %vm563, %v562, 0
  %v565 = vshrl.u32 %v564, 5
  %v566 = vand.u32 %v564, 31
  %v567 = vsub.s32 32, %v566
  %v568 = vshrl.u32 683565275, %v567
  %v569 = vshll.u32 683565275, %v566
  %v570 = vshrl.u32 2475754826, %v567
  %v571 = vor.u32 %v569, %v570
  %v572 = vshll.u32 2475754826, %v566
  %v573 = vshrl.u32 2131351028, %v567
  %v574 = vor.u32 %v572, %v573
  %v575 = vshll.u32 2131351028, %v566
  %v576 = vshrl.u32 2102212464, %v567
  %v577 = vor.u32 %v575, %v576
  %v578 = vshll.u32 2102212464, %v566
  %v579 = vshrl.u32 920167782, %v567
  %v580 = vor.u32 %v578, %v579
  %v581 = vshll.u32 920167782, %v566
  %v582 = vshrl.u32 1326507024, %v567
  %v583 = vor.u32 %v581, %v582
  %vm584 = vcmp.lt.s32.totalorder %v565, 1
  %vm585 = vcmp.lt.s32.totalorder %v565, 2
  %vm586 = vcmp.lt.s32.totalorder %v565, 3
  %vm587 = vcmp.lt.s32.totalorder %v565, 4
  %v588 = vsel %vm584, %v568, %v571
  %v589 = vsel %vm587, %v577, 2102212464
  %v590 = vsel %vm586, %v574, %v589
  %v591 = vsel %vm585, %v588, %v590
  %v592 = vsel %vm584, %v571, %v574
  %v593 = vsel %vm587, %v580, 920167782
  %v594 = vsel %vm586, %v577, %v593
  %v595 = vsel %vm585, %v592, %v594
  %v596 = vsel %vm584, %v574, %v577
  %v597 = vsel %vm587, %v583, 1326507024
  %v598 = vsel %vm586, %v580, %v597
  %v599 = vsel %vm585, %v596, %v598
  %v600 = vshll.u32 %v560, 8
  %v601 = vmul.u32.u64.compose %v600, %v599
  %v602 = vextract.low.u32 %v601
  %v603 = vextract.high.u32 %v601
  %v604 = vmul.u32.u64.compose %v600, %v595
  %v605 = vextract.low.u32 %v604
  %v606 = vextract.high.u32 %v604
  %v607 = vmul.u32 %v600, %v591
  %v608 = vadd.s32 %v603, %v605
  %vm609 = vc.u32 %v603, %v605
  %v610 = vadd.s32 %v606, 1
  %v611 = vsel %vm609, %v610, %v606
  %v612 = vadd.s32 %v607, %v611
  %v613 = vadd.s32 %v612, 536870912
  %v614 = vshrl.u32 %v613, 30
  %v615 = vshll.u32 %v614, 30
  %v616 = vsub.s32 %v612, %v615
  %vm617 = vcmp.lt.s32.totalorder %v616, 0
  %v618 = vsub.s32 0, %v616
  %v619 = vsel %vm617, %v618, %v616
  %v620 = vclz %v619
  %v621 = vsub.s32 %v620, 2
  %vm622 = vcmp.gt.s32.totalorder 0, %v621
  %v623 = vsel %vm622, 0, %v621
  %v624 = vsub.s32 32, %v623
  %v625 = vshll.u32 %v616, %v623
  %v626 = vshrl.u32 %v608, %v624
  %v627 = vor.u32 %v625, %v626
  %v628 = vsub.s32 4294967266, %v623
  %v629 = vadd.s32 %v628, 127
  %v630 = vshll.u32 %v629, 23
  %v631 = vor.u32 4788187, %v630
  %v632 = vand.u32 2147483647, %v631
  %v634 = vcvt.s32.f32 %v627
  %v635 = vmul.f32 %v634, %v632
  %v636 = vxor.u32 %v635, 2147483648
  %v637 = vsel %vm554, %v636, %v635
  %v638 = vsub.s32 4, %v614
  %v639 = vsel %vm554, %v638, %v614
  %v640 = vsel %vm553, %v11, %v637
  %v641 = vsel %vm553, 0, %v639
  %v642 = vcosq.f32.pop %v640
  %v643 = vsinq.f32.pop %v640
  %vm644 = vweird.f32 %v11
  %v645 = vadd.s32 %v641, 3
  %v646 = vand.u32 %v645, 3
  %vm647 = vcmp.lt.s32.totalorder %v646, 2
  %vm648 = vcmp.eq.s32.totalorder %v646, 0
  %v649 = vxor.u32 %v643, 2147483648
  %v650 = vsel %vm648, %v642, %v649
  %vm651 = vcmp.eq.s32.totalorder %v646, 2
  %v652 = vxor.u32 %v642, 2147483648
  %v653 = vsel %vm651, %v652, %v643
  %v654 = vsel %vm647, %v650, %v653
  %v655 = vsel %vm644, nan, %v654
  %v656 = vand.u32 2147483647, %v12
  %vm657 = vcmp.le.f32.partialorder %v656, 0.7853982
  %vm658 = vcmp.lt.s32.totalorder %v12, 0
  %v659 = vand.u32 %v12, 2139095040
  %v660 = vshrl.u32 %v659, 23
  %v661 = vsub.s32 %v660, 127
  %v662 = vand.u32 2147483647, %v12
  %v663 = vand.u32 %v662, 8388607
  %v664 = vor.u32 %v663, 8388608
  %v665 = vsub.s32 0, %v664
  %v666 = vadd.s32 %v661, 1
  %vm667 = vcmp.gt.s32.totalorder %v666, 0
  %v668 = vsel %vm667, %v666, 0
  %v669 = vshrl.u32 %v668, 5
  %v670 = vand.u32 %v668, 31
  %v671 = vsub.s32 32, %v670
  %v672 = vshrl.u32 683565275, %v671
  %v673 = vshll.u32 683565275, %v670
  %v674 = vshrl.u32 2475754826, %v671
  %v675 = vor.u32 %v673, %v674
  %v676 = vshll.u32 2475754826, %v670
  %v677 = vshrl.u32 2131351028, %v671
  %v678 = vor.u32 %v676, %v677
  %v679 = vshll.u32 2131351028, %v670
  %v680 = vshrl.u32 2102212464, %v671
  %v681 = vor.u32 %v679, %v680
  %v682 = vshll.u32 2102212464, %v670
  %v683 = vshrl.u32 920167782, %v671
  %v684 = vor.u32 %v682, %v683
  %v685 = vshll.u32 920167782, %v670
  %v686 = vshrl.u32 1326507024, %v671
  %v687 = vor.u32 %v685, %v686
  %vm688 = vcmp.lt.s32.totalorder %v669, 1
  %vm689 = vcmp.lt.s32.totalorder %v669, 2
  %vm690 = vcmp.lt.s32.totalorder %v669, 3
  %vm691 = vcmp.lt.s32.totalorder %v669, 4
  %v692 = vsel %vm688, %v672, %v675
  %v693 = vsel %vm691, %v681, 2102212464
  %v694 = vsel %vm690, %v678, %v693
  %v695 = vsel %vm689, %v692, %v694
  %v696 = vsel %vm688, %v675, %v678
  %v697 = vsel %vm691, %v684, 920167782
  %v698 = vsel %vm690, %v681, %v697
  %v699 = vsel %vm689, %v696, %v698
  %v700 = vsel %vm688, %v678, %v681
  %v701 = vsel %vm691, %v687, 1326507024
  %v702 = vsel %vm690, %v684, %v701
  %v703 = vsel %vm689, %v700, %v702
  %v704 = vshll.u32 %v664, 8
  %v705 = vmul.u32.u64.compose %v704, %v703
  %v706 = vextract.low.u32 %v705
  %v707 = vextract.high.u32 %v705
  %v708 = vmul.u32.u64.compose %v704, %v699
  %v709 = vextract.low.u32 %v708
  %v710 = vextract.high.u32 %v708
  %v711 = vmul.u32 %v704, %v695
  %v712 = vadd.s32 %v707, %v709
  %vm713 = vc.u32 %v707, %v709
  %v714 = vadd.s32 %v710, 1
  %v715 = vsel %vm713, %v714, %v710
  %v716 = vadd.s32 %v711, %v715
  %v717 = vadd.s32 %v716, 536870912
  %v718 = vshrl.u32 %v717, 30
  %v719 = vshll.u32 %v718, 30
  %v720 = vsub.s32 %v716, %v719
  %vm721 = vcmp.lt.s32.totalorder %v720, 0
  %v722 = vsub.s32 0, %v720
  %v723 = vsel %vm721, %v722, %v720
  %v724 = vclz %v723
  %v725 = vsub.s32 %v724, 2
  %vm726 = vcmp.gt.s32.totalorder 0, %v725
  %v727 = vsel %vm726, 0, %v725
  %v728 = vsub.s32 32, %v727
  %v729 = vshll.u32 %v720, %v727
  %v730 = vshrl.u32 %v712, %v728
  %v731 = vor.u32 %v729, %v730
  %v732 = vsub.s32 4294967266, %v727
  %v733 = vadd.s32 %v732, 127
  %v734 = vshll.u32 %v733, 23
  %v735 = vor.u32 4788187, %v734
  %v736 = vand.u32 2147483647, %v735
  %v738 = vcvt.s32.f32 %v731
  %v739 = vmul.f32 %v738, %v736
  %v740 = vxor.u32 %v739, 2147483648
  %v741 = vsel %vm658, %v740, %v739
  %v742 = vsub.s32 4, %v718
  %v743 = vsel %vm658, %v742, %v718
  %v744 = vsel %vm657, %v12, %v741
  %v745 = vsel %vm657, 0, %v743
  %v746 = vcosq.f32.pop %v744
  %v747 = vsinq.f32.pop %v744
  %vm748 = vweird.f32 %v12
  %v749 = vadd.s32 %v745, 3
  %v750 = vand.u32 %v749, 3
  %vm751 = vcmp.lt.s32.totalorder %v750, 2
  %vm752 = vcmp.eq.s32.totalorder %v750, 0
  %v753 = vxor.u32 %v747, 2147483648
  %v754 = vsel %vm752, %v746, %v753
  %vm755 = vcmp.eq.s32.totalorder %v750, 2
  %v756 = vxor.u32 %v746, 2147483648
  %v757 = vsel %vm755, %v756, %v747
  %v758 = vsel %vm751, %v754, %v757
  %v759 = vsel %vm748, nan, %v758
  %v760 = vand.u32 2147483647, %v13
  %vm761 = vcmp.le.f32.partialorder %v760, 0.7853982
  %vm762 = vcmp.lt.s32.totalorder %v13, 0
  %v763 = vand.u32 %v13, 2139095040
  %v764 = vshrl.u32 %v763, 23
  %v765 = vsub.s32 %v764, 127
  %v766 = vand.u32 2147483647, %v13
  %v767 = vand.u32 %v766, 8388607
  %v768 = vor.u32 %v767, 8388608
  %v769 = vsub.s32 0, %v768
  %v770 = vadd.s32 %v765, 1
  %vm771 = vcmp.gt.s32.totalorder %v770, 0
  %v772 = vsel %vm771, %v770, 0
  %v773 = vshrl.u32 %v772, 5
  %v774 = vand.u32 %v772, 31
  %v775 = vsub.s32 32, %v774
  %v776 = vshrl.u32 683565275, %v775
  %v777 = vshll.u32 683565275, %v774
  %v778 = vshrl.u32 2475754826, %v775
  %v779 = vor.u32 %v777, %v778
  %v780 = vshll.u32 2475754826, %v774
  %v781 = vshrl.u32 2131351028, %v775
  %v782 = vor.u32 %v780, %v781
  %v783 = vshll.u32 2131351028, %v774
  %v784 = vshrl.u32 2102212464, %v775
  %v785 = vor.u32 %v783, %v784
  %v786 = vshll.u32 2102212464, %v774
  %v787 = vshrl.u32 920167782, %v775
  %v788 = vor.u32 %v786, %v787
  %v789 = vshll.u32 920167782, %v774
  %v790 = vshrl.u32 1326507024, %v775
  %v791 = vor.u32 %v789, %v790
  %vm792 = vcmp.lt.s32.totalorder %v773, 1
  %vm793 = vcmp.lt.s32.totalorder %v773, 2
  %vm794 = vcmp.lt.s32.totalorder %v773, 3
  %vm795 = vcmp.lt.s32.totalorder %v773, 4
  %v796 = vsel %vm792, %v776, %v779
  %v797 = vsel %vm795, %v785, 2102212464
  %v798 = vsel %vm794, %v782, %v797
  %v799 = vsel %vm793, %v796, %v798
  %v800 = vsel %vm792, %v779, %v782
  %v801 = vsel %vm795, %v788, 920167782
  %v802 = vsel %vm794, %v785, %v801
  %v803 = vsel %vm793, %v800, %v802
  %v804 = vsel %vm792, %v782, %v785
  %v805 = vsel %vm795, %v791, 1326507024
  %v806 = vsel %vm794, %v788, %v805
  %v807 = vsel %vm793, %v804, %v806
  %v808 = vshll.u32 %v768, 8
  %v809 = vmul.u32.u64.compose %v808, %v807
  %v810 = vextract.low.u32 %v809
  %v811 = vextract.high.u32 %v809
  %v812 = vmul.u32.u64.compose %v808, %v803
  %v813 = vextract.low.u32 %v812
  %v814 = vextract.high.u32 %v812
  %v815 = vmul.u32 %v808, %v799
  %v816 = vadd.s32 %v811, %v813
  %vm817 = vc.u32 %v811, %v813
  %v818 = vadd.s32 %v814, 1
  %v819 = vsel %vm817, %v818, %v814
  %v820 = vadd.s32 %v815, %v819
  %v821 = vadd.s32 %v820, 536870912
  %v822 = vshrl.u32 %v821, 30
  %v823 = vshll.u32 %v822, 30
  %v824 = vsub.s32 %v820, %v823
  %vm825 = vcmp.lt.s32.totalorder %v824, 0
  %v826 = vsub.s32 0, %v824
  %v827 = vsel %vm825, %v826, %v824
  %v828 = vclz %v827
  %v829 = vsub.s32 %v828, 2
  %vm830 = vcmp.gt.s32.totalorder 0, %v829
  %v831 = vsel %vm830, 0, %v829
  %v832 = vsub.s32 32, %v831
  %v833 = vshll.u32 %v824, %v831
  %v834 = vshrl.u32 %v816, %v832
  %v835 = vor.u32 %v833, %v834
  %v836 = vsub.s32 4294967266, %v831
  %v837 = vadd.s32 %v836, 127
  %v838 = vshll.u32 %v837, 23
  %v839 = vor.u32 4788187, %v838
  %v840 = vand.u32 2147483647, %v839
  %v842 = vcvt.s32.f32 %v835
  %v843 = vmul.f32 %v842, %v840
  %v844 = vxor.u32 %v843, 2147483648
  %v845 = vsel %vm762, %v844, %v843
  %v846 = vsub.s32 4, %v822
  %v847 = vsel %vm762, %v846, %v822
  %v848 = vsel %vm761, %v13, %v845
  %v849 = vsel %vm761, 0, %v847
  %v850 = vcosq.f32.pop %v848
  %v851 = vsinq.f32.pop %v848
  %vm852 = vweird.f32 %v13
  %v853 = vadd.s32 %v849, 3
  %v854 = vand.u32 %v853, 3
  %vm855 = vcmp.lt.s32.totalorder %v854, 2
  %vm856 = vcmp.eq.s32.totalorder %v854, 0
  %v857 = vxor.u32 %v851, 2147483648
  %v858 = vsel %vm856, %v850, %v857
  %vm859 = vcmp.eq.s32.totalorder %v854, 2
  %v860 = vxor.u32 %v850, 2147483648
  %v861 = vsel %vm859, %v860, %v851
  %v862 = vsel %vm855, %v858, %v861
  %v863 = vsel %vm852, nan, %v862
  %864 = vst.msk [vmem:[%s2] sm:$0xff] %vm443, %v551
  %865 = vst.msk [vmem:[%s2 + $0x8] sm:$0xff] %vm443, %v655
  %866 = vst.msk [vmem:[%s2 + $0x20] sm:$0xff] %vm443, %v759
  %867 = vst.msk [vmem:[%s2 + $0x28] sm:$0xff] %vm443, %v863
  // Predicated region
  $region6: #{forward.5} parent=0 // pred_check
    _
  $region7: #{forward.5} parent=0 // pred_check_branch
    %869 = sbr.rel (0) target = $region9
  $region8: #{forward.5} parent=0 // pred_region
    _
  $region9: #{forward.5} parent=0 // pred_fallthru
    _
  // Predicated region
  $region10: #{forward.5} parent=0 // pred_check
    _
  $region11: #{forward.5} parent=0 // pred_check_branch
    %871 = sbr.rel (0) target = $region13
  $region12: #{forward.5} parent=0 // pred_region
    _
  $region13: #{forward.5} parent=0 // pred_fallthru
    _
  // Predicated region
  $region14: #{forward.5} parent=0 // pred_check
    _
  $region15: #{forward.5} parent=0 // pred_check_branch
    %873 = sbr.rel (0) target = $region17
  $region16: #{forward.5} parent=0 // pred_region
    _
  $region17: #{forward.5} parent=0 // pred_fallthru
    _
  // Predicated region
  $region18: #{forward.5} parent=0 // pred_check
    _
  $region19: #{forward.5} parent=0 // pred_check_branch
    %875 = sbr.rel (0) target = $region21
  $region20: #{forward.5} parent=0 // pred_region
    _
  $region21: #{forward.5} parent=0 // pred_fallthru
    _

// kernel: forward.4
$region0: #{forward.4}
  #allocation0 [shape = 'u32[]', space=smem, size = 0x4, offset = 0x4, fixed_abs, tag = 'smem constant byte address 0x4 - core index']
  #allocation1 [shape = 'u32[144,128]{1,0:T(1,128)}', space=vmem, size = 0x12000, scoped, tag = 'internal scratch']
  %s0 = inlined_call_operand.vmem [shape: f32[32,16], index: 0, kind: input, shape index: {}]
  %s1 = inlined_call_operand.vmem [shape: f32[16,128], index: 1, kind: input, shape index: {}]
  %s2 = inlined_call_operand.vmem [shape: f32[1,128], index: 2, kind: input, shape index: {}]
  %s3 = inlined_call_operand.vmem [shape: f32[64,128], index: 3, kind: input, shape index: {}]
  %s4 = inlined_call_operand.vmem [shape: f32[128,16], index: 4, kind: input, shape index: {}]
  %s5 = inlined_call_operand.vmem [shape: f32[1,16], index: 5, kind: input, shape index: {}]
  %s6 = inlined_call_operand.hbm [shape: f32[32,128], index: 6, kind: output, shape index: {0}]
  %s7 = inlined_call_operand.hbm [shape: f32[32,128], index: 7, kind: output, shape index: {1}]
  %s8 = inlined_call_operand.vmem [shape: f32[32,16], index: 8, kind: output, shape index: {2}]
  %9 = xla_tuple %s6, %s7, %s8
  %s10 = sld [smem:[#allocation0]]
  $region50: #{forward.4} parent=0
    _
  %s12 = ssub.s32 1, %s10
  %s13 = scalar_select 0, %s12, %s10
  $region1: #{forward.4} parent=0
    #allocation2 [shape = 'u8[16384]{0}', space=vmem, size = 0x4000, scoped, tag = 'output window, operand 0, single buffered']
    #allocation3 [shape = 's32[1]{0}', space=sflag, size = 0x4, scoped, tag = 'scoped memory for forward.4']
    #allocation4 [shape = 'u8[16384]{0}', space=vmem, size = 0x4000, scoped, tag = 'output window, operand 1, single buffered']
    #allocation5 [shape = 's32[1]{0}', space=sflag, size = 0x4, scoped, tag = 'scoped memory for forward.4']
    %14 = vsyncpa [#allocation3], 0
    %15 = vsyncpa [#allocation5], 0
    // Predicated region
    $region2: #{forward.4} parent=1 // pred_check
      _
    $region3: #{forward.4} parent=1 // pred_check_branch
      %17 = sbr.rel (0) target = $region5
    $region4: #{forward.4} parent=1 // pred_region
      _
    $region5: #{forward.4} parent=1 // pred_fallthru
      _
    // Predicated region
    $region6: #{forward.4} parent=1 // pred_check
      _
    $region7: #{forward.4} parent=1 // pred_check_branch
      %19 = sbr.rel (0) target = $region9
    $region8: #{forward.4} parent=1 // pred_region
      _
    $region9: #{forward.4} parent=1 // pred_fallthru
      _
    // Predicated region
    $region10: #{forward.4} parent=1 // pred_check
      _
    $region11: #{forward.4} parent=1 // pred_check_branch
      %21 = sbr.rel (0) target = $region13
    $region12: #{forward.4} parent=1 // pred_region
      _
    $region13: #{forward.4} parent=1 // pred_fallthru
      _
    // Predicated region
    $region14: #{forward.4} parent=1 // pred_check
      _
    $region15: #{forward.4} parent=1 // pred_check_branch
      %23 = sbr.rel (0) target = $region17
    $region16: #{forward.4} parent=1 // pred_region
      _
    $region17: #{forward.4} parent=1 // pred_fallthru
      _
    // Predicated region
    $region18: #{forward.4} parent=1 // pred_check
      _
    $region19: #{forward.4} parent=1 // pred_check_branch
      %25 = sbr.rel (0) target = $region21
    $region20: #{forward.4} parent=1 // pred_region
      _
    $region21: #{forward.4} parent=1 // pred_fallthru
      _
    // Predicated region
    $region22: #{forward.4} parent=1 // pred_check
      _
    $region23: #{forward.4} parent=1 // pred_check_branch
      %27 = sbr.rel (0) target = $region25
    $region24: #{forward.4} parent=1 // pred_region
      _
    $region25: #{forward.4} parent=1 // pred_fallthru
      _
    %v28 = vld [vmem:[%s0] sm:$0xff]
    %v29 = vld [vmem:[%s0 + $0x8] sm:$0xff]
    %v30 = vld [vmem:[%s0 + $0x10] sm:$0xff]
    %v31 = vld [vmem:[%s0 + $0x18] sm:$0xff]
    %v32 = vld [vmem:[%s1] sm:$0xff]
    %v33 = vld [vmem:[%s1 + $0x8] sm:$0xff]
    %v34 = vld [vmem:[%s2] sm:$0x1]
    %v36 = vlaneseq
    %v37 = vshrl.u32 %v36, 7
    %v38 = vsub.s32 0, %v37
    %v39 = vrot.slane %v34, %v38
    %vm41 = vcmask 130048
    %v43 = vsel %vm41, %v28, 0
    %v46 = vsel %vm41, %v29, 0
    %v49 = vsel %vm41, %v30, 0
    %v52 = vsel %vm41, %v31, 0
    %54 = vmatprep.subr.mxu0 0.0
    %55 = vmatpush1.msra.mxu0 %v32
    %56 = vmatprep.subr.mxu0 0.0
    %57 = vmatpush1.msra.mxu0 %v33
    %58 = vmatprep.subr.mxu0 0.0
    %59 = vmatpush1.msra.mxu0 0.0
    %60 = vmatprep.subr.mxu0 0.0
    %61 = vmatpush1.msra.mxu0 0.0
    %62 = vmatprep.subr.mxu0 0.0
    %63 = vmatpush1.msra.mxu0 0.0
    %64 = vmatprep.subr.mxu0 0.0
    %65 = vmatpush1.msra.mxu0 0.0
    %66 = vmatprep.subr.mxu0 0.0
    %67 = vmatpush1.msra.mxu0 0.0
    %68 = vmatprep.subr.mxu0 0.0
    %69 = vmatpush1.msra.mxu0 0.0
    %70 = vmatprep.subr.mxu0 0.0
    %71 = vmatpush1.msra.mxu0 0.0
    %72 = vmatprep.subr.mxu0 0.0
    %73 = vmatpush1.msra.mxu0 0.0
    %74 = vmatprep.subr.mxu0 0.0
    %75 = vmatpush1.msra.mxu0 0.0
    %76 = vmatprep.subr.mxu0 0.0
    %77 = vmatpush1.msra.mxu0 0.0
    %78 = vmatprep.subr.mxu0 0.0
    %79 = vmatpush1.msra.mxu0 0.0
    %80 = vmatprep.subr.mxu0 0.0
    %81 = vmatpush1.msra.mxu0 0.0
    %82 = vmatprep.subr.mxu0 0.0
    %83 = vmatpush1.msra.mxu0 0.0
    %84 = vmatprep.subr.mxu0 0.0
    %85 = vmatpush1.msra.mxu0 0.0
    %86 = vmatprep.subr.mxu0 0.0
    %87 = vmatpush1.msra.mxu0 0.0
    %88 = vmatprep.subr.mxu0 0.0
    %89 = vmatpush1.msra.mxu0 0.0
    %90 = vmatprep.subr.mxu0 0.0
    %91 = vmatpush1.msra.mxu0 0.0
    %92 = vmatprep.subr.mxu0 0.0
    %93 = vmatpush1.msra.mxu0 0.0
    %94 = vmatprep.subr.mxu0 0.0
    %95 = vmatpush1.msra.mxu0 0.0
    %96 = vmatprep.subr.mxu0 0.0
    %97 = vmatpush1.msra.mxu0 0.0
    %98 = vmatprep.subr.mxu0 0.0
    %99 = vmatpush1.msra.mxu0 0.0
    %100 = vmatprep.subr.mxu0 0.0
    %101 = vmatpush1.msra.mxu0 0.0
    %102 = vmatprep.subr.mxu0 0.0
    %103 = vmatpush1.msra.mxu0 0.0
    %104 = vmatprep.subr.mxu0 0.0
    %105 = vmatpush1.msra.mxu0 0.0
    %106 = vmatprep.subr.mxu0 0.0
    %107 = vmatpush1.msra.mxu0 0.0
    %108 = vmatprep.subr.mxu0 0.0
    %109 = vmatpush1.msra.mxu0 0.0
    %110 = vmatprep.subr.mxu0 0.0
    %111 = vmatpush1.msra.mxu0 0.0
    %112 = vmatprep.subr.mxu0 0.0
    %113 = vmatpush1.msra.mxu0 0.0
    %114 = vmatprep.subr.mxu0 0.0
    %115 = vmatpush1.msra.mxu0 0.0
    %116 = vmatprep.subr.mxu0 0.0
    %117 = vmatpush1.msra.mxu0 0.0
    %118 = vmatprep.mubr.f32.mxu0 0.0
    %119 = vmatmul.mubr.f32.gmra.mrb[0].mxu0 %v43
    %v120 = vpop.f32.mrb[0].mxu0
    %v121 = vadd.f32 %v39, %v120
    %v122 = vpop.f32.mrb[0].mxu0
    %123 = vmatprep.mubr.f32.mxu0 0.0
    %124 = vmatmul.mubr.f32.gmra.mrb[0].mxu0 %v46
    %v125 = vpop.f32.mrb[0].mxu0
    %v126 = vadd.f32 %v39, %v125
    %v127 = vpop.f32.mrb[0].mxu0
    %128 = vmatprep.mubr.f32.mxu0 0.0
    %129 = vmatmul.mubr.f32.gmra.mrb[0].mxu0 %v49
    %v130 = vpop.f32.mrb[0].mxu0
    %v131 = vadd.f32 %v39, %v130
    %v132 = vpop.f32.mrb[0].mxu0
    %133 = vmatprep.mubr.f32.mxu0 0.0
    %134 = vmatmul.mubr.f32.gmra.mrb[0].mxu0 %v52
    %v135 = vpop.f32.mrb[0].mxu0
    %v136 = vadd.f32 %v39, %v135
    %v137 = vpop.f32.mrb[0].mxu0
    %138 = vdwg.mxu0
    %v139 = vld [vmem:[%s3] sm:$0xff]
    %v140 = vld [vmem:[%s3 + $0x8] sm:$0xff]
    %v141 = vld [vmem:[%s3 + $0x10] sm:$0xff]
    %v142 = vld [vmem:[%s3 + $0x18] sm:$0xff]
    %v143 = vld [vmem:[%s3 + $0x20] sm:$0xff]
    %v144 = vld [vmem:[%s3 + $0x28] sm:$0xff]
    %v145 = vld [vmem:[%s3 + $0x30] sm:$0xff]
    %v146 = vld [vmem:[%s3 + $0x38] sm:$0xff]
    %147 = vmatprep.subr.mxu0 0.0
    %148 = vmatpush1.xpose.msra.mxu0 %v139
    %149 = vmatprep.subr.mxu0 0.0
    %150 = vmatpush1.xpose.msra.mxu0 %v140
    %151 = vmatprep.subr.mxu0 0.0
    %152 = vmatpush1.xpose.msra.mxu0 %v141
    %153 = vmatprep.subr.mxu0 0.0
    %154 = vmatpush1.xpose.msra.mxu0 %v142
    %155 = vmatprep.subr.mxu0 0.0
    %156 = vmatpush1.xpose.msra.mxu0 %v143
    %157 = vmatprep.subr.mxu0 0.0
    %158 = vmatpush1.xpose.msra.mxu0 %v144
    %159 = vmatprep.subr.mxu0 0.0
    %160 = vmatpush1.xpose.msra.mxu0 %v145
    %161 = vmatprep.subr.mxu0 0.0
    %162 = vmatpush1.xpose.msra.mxu0 %v146
    %163 = vmatprep.subr.mxu0 0.0
    %164 = vmatpush1.xpose.msra.mxu0 0.0
    %165 = vmatprep.subr.mxu0 0.0
    %166 = vmatpush1.xpose.msra.mxu0 0.0
    %167 = vmatprep.subr.mxu0 0.0
    %168 = vmatpush1.xpose.msra.mxu0 0.0
    %169 = vmatprep.subr.mxu0 0.0
    %170 = vmatpush1.xpose.msra.mxu0 0.0
    %171 = vmatprep.subr.mxu0 0.0
    %172 = vmatpush1.xpose.msra.mxu0 0.0
    %173 = vmatprep.subr.mxu0 0.0
    %174 = vmatpush1.xpose.msra.mxu0 0.0
    %175 = vmatprep.subr.mxu0 0.0
    %176 = vmatpush1.xpose.msra.mxu0 0.0
    %177 = vmatprep.subr.mxu0 0.0
    %178 = vmatpush1.xpose.msra.mxu0 0.0
    %179 = vmatprep.subr.mxu0 0.0
    %180 = vmatpush1.xpose.msra.mxu0 0.0
    %181 = vmatprep.subr.mxu0 0.0
    %182 = vmatpush1.xpose.msra.mxu0 0.0
    %183 = vmatprep.subr.mxu0 0.0
    %184 = vmatpush1.xpose.msra.mxu0 0.0
    %185 = vmatprep.subr.mxu0 0.0
    %186 = vmatpush1.xpose.msra.mxu0 0.0
    %187 = vmatprep.subr.mxu0 0.0
    %188 = vmatpush1.xpose.msra.mxu0 0.0
    %189 = vmatprep.subr.mxu0 0.0
    %190 = vmatpush1.xpose.msra.mxu0 0.0
    %191 = vmatprep.subr.mxu0 0.0
    %192 = vmatpush1.xpose.msra.mxu0 0.0
    %193 = vmatprep.subr.mxu0 0.0
    %194 = vmatpush1.xpose.msra.mxu0 0.0
    %195 = vmatprep.subr.mxu0 0.0
    %196 = vmatpush1.xpose.msra.mxu0 0.0
    %197 = vmatprep.subr.mxu0 0.0
    %198 = vmatpush1.xpose.msra.mxu0 0.0
    %199 = vmatprep.subr.mxu0 0.0
    %200 = vmatpush1.xpose.msra.mxu0 0.0
    %201 = vmatprep.subr.mxu0 0.0
    %202 = vmatpush1.xpose.msra.mxu0 0.0
    %203 = vmatprep.subr.mxu0 0.0
    %204 = vmatpush1.xpose.msra.mxu0 0.0
    %205 = vmatprep.subr.mxu0 0.0
    %206 = vmatpush1.xpose.msra.mxu0 0.0
    %207 = vmatprep.subr.mxu0 0.0
    %208 = vmatpush1.xpose.msra.mxu0 0.0
    %209 = vmatprep.subr.mxu0 0.0
    %210 = vmatpush1.xpose.msra.mxu0 0.0
    %211 = vmatprep.mubr.f32.mxu0 0.0
    %212 = vmatmul.mubr.f32.gmra.mrb[0].mxu0 %v121
    %v213 = vpop.f32.mrb[0].mxu0
    %v214 = vadd.f32 0.0, %v213
    %v215 = vpop.f32.mrb[0].mxu0
    %216 = vmatprep.mubr.f32.mxu0 0.0
    %217 = vmatmul.mubr.f32.gmra.mrb[0].mxu0 %v126
    %v218 = vpop.f32.mrb[0].mxu0
    %v219 = vadd.f32 0.0, %v218
    %v220 = vpop.f32.mrb[0].mxu0
    %221 = vmatprep.mubr.f32.mxu0 0.0
    %222 = vmatmul.mubr.f32.gmra.mrb[0].mxu0 %v131
    %v223 = vpop.f32.mrb[0].mxu0
    %v224 = vadd.f32 0.0, %v223
    %v225 = vpop.f32.mrb[0].mxu0
    %226 = vmatprep.mubr.f32.mxu0 0.0
    %227 = vmatmul.mubr.f32.gmra.mrb[0].mxu0 %v136
    %v228 = vpop.f32.mrb[0].mxu0
    %v229 = vadd.f32 0.0, %v228
    %v230 = vpop.f32.mrb[0].mxu0
    %231 = vdwg.mxu0
    %v232 = vmul.f32 %v139, %v139
    %v233 = vmul.f32 %v140, %v140
    %v234 = vmul.f32 %v141, %v141
    %v235 = vmul.f32 %v142, %v142
    %v236 = vmul.f32 %v143, %v143
    %v237 = vmul.f32 %v144, %v144
    %v238 = vmul.f32 %v145, %v145
    %v239 = vmul.f32 %v146, %v146
    %240 = vadd.xlane.f32.xlu0 %v232
    %v241 = vpop.xlane.xlu0 %240
    %242 = vadd.xlane.f32.xlu0 %v233
    %v243 = vpop.xlane.xlu0 %242
    %244 = vadd.xlane.f32.xlu0 %v234
    %v245 = vpop.xlane.xlu0 %244
    %246 = vadd.xlane.f32.xlu0 %v235
    %v247 = vpop.xlane.xlu0 %246
    %248 = vadd.xlane.f32.xlu0 %v236
    %v249 = vpop.xlane.xlu0 %248
    %250 = vadd.xlane.f32.xlu0 %v237
    %v251 = vpop.xlane.xlu0 %250
    %252 = vadd.xlane.f32.xlu0 %v238
    %v253 = vpop.xlane.xlu0 %252
    %254 = vadd.xlane.f32.xlu0 %v239
    %v255 = vpop.xlane.xlu0 %254
    %256 = vxpose.xlu0.b32.start [1/16] %v241, 128
    %257 = vxpose.xlu0.b32.cont [2/16] %v243, 128
    %258 = vxpose.xlu0.b32.cont [3/16] %v245, 128
    %259 = vxpose.xlu0.b32.cont [4/16] %v247, 128
    %260 = vxpose.xlu0.b32.cont [5/16] %v249, 128
    %261 = vxpose.xlu0.b32.cont [6/16] %v251, 128
    %262 = vxpose.xlu0.b32.cont [7/16] %v253, 128
    %263 = vxpose.xlu0.b32.cont [8/16] %v255, 128
    %264 = vxpose.xlu0.b32.cont [9/16] 0.0, 128
    %265 = vxpose.xlu0.b32.cont [10/16] 0.0, 128
    %266 = vxpose.xlu0.b32.cont [11/16] 0.0, 128
    %267 = vxpose.xlu0.b32.cont [12/16] 0.0, 128
    %268 = vxpose.xlu0.b32.cont [13/16] 0.0, 128
    %269 = vxpose.xlu0.b32.cont [14/16] 0.0, 128
    %270 = vxpose.xlu0.b32.cont [15/16] 0.0, 128
    %271 = vxpose.xlu0.b32.end [16/16] 0.0, 128
    %v272 = vpop.trf.xlu0
    %v273 = vpop.trf.xlu0
    %v274 = vpop.trf.xlu0
    %v275 = vpop.trf.xlu0
    %v276 = vpop.trf.xlu0
    %v277 = vpop.trf.xlu0
    %v278 = vpop.trf.xlu0
    %v279 = vpop.trf.xlu0
    %v280 = vpop.trf.xlu0
    %v281 = vpop.trf.xlu0
    %v282 = vpop.trf.xlu0
    %v283 = vpop.trf.xlu0
    %v284 = vpop.trf.xlu0
    %v285 = vpop.trf.xlu0
    %v286 = vpop.trf.xlu0
    %v287 = vpop.trf.xlu0
    %v288 = vmul.f32 %v214, 2.0
    %v289 = vmul.f32 %v219, 2.0
    %v290 = vmul.f32 %v224, 2.0
    %v291 = vmul.f32 %v229, 2.0
    %v292 = vlaneseq
    %v293 = vshrl.u32 %v292, 7
    %v294 = vsub.s32 0, %v293
    %v295 = vrot.slane %v272, %v294
    %v296 = vsub.f32 %v295, %v288
    %v297 = vsub.f32 %v295, %v289
    %v298 = vsub.f32 %v295, %v290
    %v299 = vsub.f32 %v295, %v291
    %vm300 = vcmask 523264
    %v301 = vsel %vm300, %v296, inf
    %302 = vmin.xlane.f32.xlu0 %v301
    %v303 = vpop.xlane.xlu0 %302
    %v304 = vsel %vm300, %v297, inf
    %305 = vmin.xlane.f32.xlu0 %v304
    %v306 = vpop.xlane.xlu0 %305
    %v307 = vsel %vm300, %v298, inf
    %308 = vmin.xlane.f32.xlu0 %v307
    %v309 = vpop.xlane.xlu0 %308
    %v310 = vsel %vm300, %v299, inf
    %311 = vmin.xlane.f32.xlu0 %v310
    %v312 = vpop.xlane.xlu0 %311
    %v313 = vlaneseq
    %v314 = vand.u32 %v313, 127
    %vm315 = vcmp.eq.f32.partialorder %v296, %v303
    %vm316 = vcmp.eq.f32.partialorder %v297, %v306
    %vm317 = vcmp.eq.f32.partialorder %v298, %v309
    %vm318 = vcmp.eq.f32.partialorder %v299, %v312
    %v319 = vsel %vm315, %v314, 64
    %v320 = vsel %vm316, %v314, 64
    %v321 = vsel %vm317, %v314, 64
    %v322 = vsel %vm318, %v314, 64
    %v323 = vsel %vm300, %v319, 2147483647
    %v324 = vand.u32 %v323, 65535
    %v325 = vshra.s32 %v323, 16
    %v326 = vcvt.s32.f32 %v324
    %v327 = vcvt.s32.f32 %v325
    %328 = vmin.xlane.f32.xlu0 %v327
    %v329 = vpop.xlane.xlu0 %328
    %vm330 = vcmp.eq.f32.partialorder %v327, %v329
    %v331 = vsel %vm330, %v326, inf
    %332 = vmin.xlane.f32.xlu0 %v331
    %v333 = vpop.xlane.xlu0 %332
    %v334 = vcvt.f32.s32 %v333
    %v335 = vcvt.f32.s32 %v329
    %v336 = vshll.u32 %v335, 16
    %v337 = vadd.s32 %v336, %v334
    %v338 = vsel %vm300, %v320, 2147483647
    %v339 = vand.u32 %v338, 65535
    %v340 = vshra.s32 %v338, 16
    %v341 = vcvt.s32.f32 %v339
    %v342 = vcvt.s32.f32 %v340
    %343 = vmin.xlane.f32.xlu0 %v342
    %v344 = vpop.xlane.xlu0 %343
    %vm345 = vcmp.eq.f32.partialorder %v342, %v344
    %v346 = vsel %vm345, %v341, inf
    %347 = vmin.xlane.f32.xlu0 %v346
    %v348 = vpop.xlane.xlu0 %347
    %v349 = vcvt.f32.s32 %v348
    %v350 = vcvt.f32.s32 %v344
    %v351 = vshll.u32 %v350, 16
    %v352 = vadd.s32 %v351, %v349
    %v353 = vsel %vm300, %v321, 2147483647
    %v354 = vand.u32 %v353, 65535
    %v355 = vshra.s32 %v353, 16
    %v356 = vcvt.s32.f32 %v354
    %v357 = vcvt.s32.f32 %v355
    %358 = vmin.xlane.f32.xlu0 %v357
    %v359 = vpop.xlane.xlu0 %358
    %vm360 = vcmp.eq.f32.partialorder %v357, %v359
    %v361 = vsel %vm360, %v356, inf
    %362 = vmin.xlane.f32.xlu0 %v361
    %v363 = vpop.xlane.xlu0 %362
    %v364 = vcvt.f32.s32 %v363
    %v365 = vcvt.f32.s32 %v359
    %v366 = vshll.u32 %v365, 16
    %v367 = vadd.s32 %v366, %v364
    %v368 = vsel %vm300, %v322, 2147483647
    %v369 = vand.u32 %v368, 65535
    %v370 = vshra.s32 %v368, 16
    %v371 = vcvt.s32.f32 %v369
    %v372 = vcvt.s32.f32 %v370
    %373 = vmin.xlane.f32.xlu0 %v372
    %v374 = vpop.xlane.xlu0 %373
    %vm375 = vcmp.eq.f32.partialorder %v372, %v374
    %v376 = vsel %vm375, %v371, inf
    %377 = vmin.xlane.f32.xlu0 %v376
    %v378 = vpop.xlane.xlu0 %377
    %v379 = vcvt.f32.s32 %v378
    %v380 = vcvt.f32.s32 %v374
    %v381 = vshll.u32 %v380, 16
    %v382 = vadd.s32 %v381, %v379
    %vm383 = vcmp.eq.s32.totalorder %v314, %v337
    %vm384 = vcmp.eq.s32.totalorder %v314, %v352
    %vm385 = vcmp.eq.s32.totalorder %v314, %v367
    %vm386 = vcmp.eq.s32.totalorder %v314, %v382
    %v387 = vsel %vm383, 1, 0
    %v388 = vsel %vm384, 1, 0
    %v389 = vsel %vm385, 1, 0
    %v390 = vsel %vm386, 1, 0
    %v391 = vcvt.s32.f32 %v387
    %v392 = vcvt.s32.f32 %v388
    %v393 = vcvt.s32.f32 %v389
    %v394 = vcvt.s32.f32 %v390
    %v396 = vsel %vm300, %v391, 0
    %v399 = vsel %vm300, %v392, 0
    %v402 = vsel %vm300, %v393, 0
    %v405 = vsel %vm300, %v394, 0
    %407 = vmatprep.subr.mxu0 0.0
    %408 = vmatpush1.msra.mxu0 %v139
    %409 = vmatprep.subr.mxu0 0.0
    %410 = vmatpush1.msra.mxu0 %v140
    %411 = vmatprep.subr.mxu0 0.0
    %412 = vmatpush1.msra.mxu0 %v141
    %413 = vmatprep.subr.mxu0 0.0
    %414 = vmatpush1.msra.mxu0 %v142
    %415 = vmatprep.subr.mxu0 0.0
    %416 = vmatpush1.msra.mxu0 %v143
    %417 = vmatprep.subr.mxu0 0.0
    %418 = vmatpush1.msra.mxu0 %v144
    %419 = vmatprep.subr.mxu0 0.0
    %420 = vmatpush1.msra.mxu0 %v145
    %421 = vmatprep.subr.mxu0 0.0
    %422 = vmatpush1.msra.mxu0 %v146
    %423 = vmatprep.subr.mxu0 0.0
    %424 = vmatpush1.msra.mxu0 0.0
    %425 = vmatprep.subr.mxu0 0.0
    %426 = vmatpush1.msra.mxu0 0.0
    %427 = vmatprep.subr.mxu0 0.0
    %428 = vmatpush1.msra.mxu0 0.0
    %429 = vmatprep.subr.mxu0 0.0
    %430 = vmatpush1.msra.mxu0 0.0
    %431 = vmatprep.subr.mxu0 0.0
    %432 = vmatpush1.msra.mxu0 0.0
    %433 = vmatprep.subr.mxu0 0.0
    %434 = vmatpush1.msra.mxu0 0.0
    %435 = vmatprep.subr.mxu0 0.0
    %436 = vmatpush1.msra.mxu0 0.0
    %437 = vmatprep.subr.mxu0 0.0
    %438 = vmatpush1.msra.mxu0 0.0
    %439 = vmatprep.subr.mxu0 0.0
    %440 = vmatpush1.msra.mxu0 0.0
    %441 = vmatprep.subr.mxu0 0.0
    %442 = vmatpush1.msra.mxu0 0.0
    %443 = vmatprep.subr.mxu0 0.0
    %444 = vmatpush1.msra.mxu0 0.0
    %445 = vmatprep.subr.mxu0 0.0
    %446 = vmatpush1.msra.mxu0 0.0
    %447 = vmatprep.subr.mxu0 0.0
    %448 = vmatpush1.msra.mxu0 0.0
    %449 = vmatprep.subr.mxu0 0.0
    %450 = vmatpush1.msra.mxu0 0.0
    %451 = vmatprep.subr.mxu0 0.0
    %452 = vmatpush1.msra.mxu0 0.0
    %453 = vmatprep.subr.mxu0 0.0
    %454 = vmatpush1.msra.mxu0 0.0
    %455 = vmatprep.subr.mxu0 0.0
    %456 = vmatpush1.msra.mxu0 0.0
    %457 = vmatprep.subr.mxu0 0.0
    %458 = vmatpush1.msra.mxu0 0.0
    %459 = vmatprep.subr.mxu0 0.0
    %460 = vmatpush1.msra.mxu0 0.0
    %461 = vmatprep.subr.mxu0 0.0
    %462 = vmatpush1.msra.mxu0 0.0
    %463 = vmatprep.subr.mxu0 0.0
    %464 = vmatpush1.msra.mxu0 0.0
    %465 = vmatprep.subr.mxu0 0.0
    %466 = vmatpush1.msra.mxu0 0.0
    %467 = vmatprep.subr.mxu0 0.0
    %468 = vmatpush1.msra.mxu0 0.0
    %469 = vmatprep.subr.mxu0 0.0
    %470 = vmatpush1.msra.mxu0 0.0
    %471 = vmatprep.mubr.f32.mxu0 0.0
    %472 = vmatmul.mubr.f32.gmra.mrb[0].mxu0 %v396
    %v473 = vpop.f32.mrb[0].mxu0
    %v474 = vadd.f32 0.0, %v473
    %v475 = vpop.f32.mrb[0].mxu0
    %476 = vmatprep.mubr.f32.mxu0 0.0
    %477 = vmatmul.mubr.f32.gmra.mrb[0].mxu0 %v399
    %v478 = vpop.f32.mrb[0].mxu0
    %v479 = vadd.f32 0.0, %v478
    %v480 = vpop.f32.mrb[0].mxu0
    %481 = vmatprep.mubr.f32.mxu0 0.0
    %482 = vmatmul.mubr.f32.gmra.mrb[0].mxu0 %v402
    %v483 = vpop.f32.mrb[0].mxu0
    %v484 = vadd.f32 0.0, %v483
    %v485 = vpop.f32.mrb[0].mxu0
    %486 = vmatprep.mubr.f32.mxu0 0.0
    %487 = vmatmul.mubr.f32.gmra.mrb[0].mxu0 %v405
    %v488 = vpop.f32.mrb[0].mxu0
    %v489 = vadd.f32 0.0, %v488
    %v490 = vpop.f32.mrb[0].mxu0
    %491 = vdwg.mxu0
    %v492 = vld [vmem:[%s4] sm:$0xff]
    %v493 = vld [vmem:[%s4 + $0x8] sm:$0xff]
    %v494 = vld [vmem:[%s4 + $0x10] sm:$0xff]
    %v495 = vld [vmem:[%s4 + $0x18] sm:$0xff]
    %v496 = vld [vmem:[%s4 + $0x20] sm:$0xff]
    %v497 = vld [vmem:[%s4 + $0x28] sm:$0xff]
    %v498 = vld [vmem:[%s4 + $0x30] sm:$0xff]
    %v499 = vld [vmem:[%s4 + $0x38] sm:$0xff]
    %v500 = vld [vmem:[%s4 + $0x40] sm:$0xff]
    %v501 = vld [vmem:[%s4 + $0x48] sm:$0xff]
    %v502 = vld [vmem:[%s4 + $0x50] sm:$0xff]
    %v503 = vld [vmem:[%s4 + $0x58] sm:$0xff]
    %v504 = vld [vmem:[%s4 + $0x60] sm:$0xff]
    %v505 = vld [vmem:[%s4 + $0x68] sm:$0xff]
    %v506 = vld [vmem:[%s4 + $0x70] sm:$0xff]
    %v507 = vld [vmem:[%s4 + $0x78] sm:$0xff]
    %v508 = vld [vmem:[%s5] sm:$0x1]
    %v510 = vlaneseq
    %v511 = vshrl.u32 %v510, 7
    %v512 = vsub.s32 0, %v511
    %v513 = vrot.slane %v508, %v512
    %515 = vmatprep.subr.mxu0 0.0
    %516 = vmatpush1.msra.mxu0 %v492
    %517 = vmatprep.subr.mxu0 0.0
    %518 = vmatpush1.msra.mxu0 %v493
    %519 = vmatprep.subr.mxu0 0.0
    %520 = vmatpush1.msra.mxu0 %v494
    %521 = vmatprep.subr.mxu0 0.0
    %522 = vmatpush1.msra.mxu0 %v495
    %523 = vmatprep.subr.mxu0 0.0
    %524 = vmatpush1.msra.mxu0 %v496
    %525 = vmatprep.subr.mxu0 0.0
    %526 = vmatpush1.msra.mxu0 %v497
    %527 = vmatprep.subr.mxu0 0.0
    %528 = vmatpush1.msra.mxu0 %v498
    %529 = vmatprep.subr.mxu0 0.0
    %530 = vmatpush1.msra.mxu0 %v499
    %531 = vmatprep.subr.mxu0 0.0
    %532 = vmatpush1.msra.mxu0 %v500
    %533 = vmatprep.subr.mxu0 0.0
    %534 = vmatpush1.msra.mxu0 %v501
    %535 = vmatprep.subr.mxu0 0.0
    %536 = vmatpush1.msra.mxu0 %v502
    %537 = vmatprep.subr.mxu0 0.0
    %538 = vmatpush1.msra.mxu0 %v503
    %539 = vmatprep.subr.mxu0 0.0
    %540 = vmatpush1.msra.mxu0 %v504
    %541 = vmatprep.subr.mxu0 0.0
    %542 = vmatpush1.msra.mxu0 %v505
    %543 = vmatprep.subr.mxu0 0.0
    %544 = vmatpush1.msra.mxu0 %v506
    %545 = vmatprep.subr.mxu0 0.0
    %546 = vmatpush1.msra.mxu0 %v507
    %547 = vmatprep.subr.mxu0 0.0
    %548 = vmatpush1.msra.mxu0 0.0
    %549 = vmatprep.subr.mxu0 0.0
    %550 = vmatpush1.msra.mxu0 0.0
    %551 = vmatprep.subr.mxu0 0.0
    %552 = vmatpush1.msra.mxu0 0.0
    %553 = vmatprep.subr.mxu0 0.0
    %554 = vmatpush1.msra.mxu0 0.0
    %555 = vmatprep.subr.mxu0 0.0
    %556 = vmatpush1.msra.mxu0 0.0
    %557 = vmatprep.subr.mxu0 0.0
    %558 = vmatpush1.msra.mxu0 0.0
    %559 = vmatprep.subr.mxu0 0.0
    %560 = vmatpush1.msra.mxu0 0.0
    %561 = vmatprep.subr.mxu0 0.0
    %562 = vmatpush1.msra.mxu0 0.0
    %563 = vmatprep.subr.mxu0 0.0
    %564 = vmatpush1.msra.mxu0 0.0
    %565 = vmatprep.subr.mxu0 0.0
    %566 = vmatpush1.msra.mxu0 0.0
    %567 = vmatprep.subr.mxu0 0.0
    %568 = vmatpush1.msra.mxu0 0.0
    %569 = vmatprep.subr.mxu0 0.0
    %570 = vmatpush1.msra.mxu0 0.0
    %571 = vmatprep.subr.mxu0 0.0
    %572 = vmatpush1.msra.mxu0 0.0
    %573 = vmatprep.subr.mxu0 0.0
    %574 = vmatpush1.msra.mxu0 0.0
    %575 = vmatprep.subr.mxu0 0.0
    %576 = vmatpush1.msra.mxu0 0.0
    %577 = vmatprep.subr.mxu0 0.0
    %578 = vmatpush1.msra.mxu0 0.0
    %579 = vmatprep.mubr.f32.mxu0 0.0
    %580 = vmatmul.mubr.f32.gmra.mrb[0].mxu0 %v474
    %v581 = vpop.f32.mrb[0].mxu0
    %v582 = vadd.f32 %v513, %v581
    %v583 = vpop.f32.mrb[0].mxu0
    %584 = vmatprep.mubr.f32.mxu0 0.0
    %585 = vmatmul.mubr.f32.gmra.mrb[0].mxu0 %v479
    %v586 = vpop.f32.mrb[0].mxu0
    %v587 = vadd.f32 %v513, %v586
    %v588 = vpop.f32.mrb[0].mxu0
    %589 = vmatprep.mubr.f32.mxu0 0.0
    %590 = vmatmul.mubr.f32.gmra.mrb[0].mxu0 %v484
    %v591 = vpop.f32.mrb[0].mxu0
    %v592 = vadd.f32 %v513, %v591
    %v593 = vpop.f32.mrb[0].mxu0
    %594 = vmatprep.mubr.f32.mxu0 0.0
    %595 = vmatmul.mubr.f32.gmra.mrb[0].mxu0 %v489
    %v596 = vpop.f32.mrb[0].mxu0
    %v597 = vadd.f32 %v513, %v596
    %v598 = vpop.f32.mrb[0].mxu0
    %599 = vdwg.mxu0
    %v600 = vmax.f32 %v582, -3.1415927
    %v601 = vmax.f32 %v587, -3.1415927
    %v602 = vmax.f32 %v592, -3.1415927
    %v603 = vmax.f32 %v597, -3.1415927
    %v604 = vmin.f32 %v600, 3.1415927
    %v605 = vmin.f32 %v601, 3.1415927
    %v606 = vmin.f32 %v602, 3.1415927
    %v607 = vmin.f32 %v603, 3.1415927
    %608 = vst [vmem:[#allocation2] sm:$0xff] %v121
    %609 = vst [vmem:[#allocation2 + $0x8] sm:$0xff] %v126
    %610 = vst [vmem:[#allocation2 + $0x10] sm:$0xff] %v131
    %611 = vst [vmem:[#allocation2 + $0x18] sm:$0xff] %v136
    %612 = vst [vmem:[#allocation4] sm:$0xff] %v474
    %613 = vst [vmem:[#allocation4 + $0x8] sm:$0xff] %v479
    %614 = vst [vmem:[#allocation4 + $0x10] sm:$0xff] %v484
    %615 = vst [vmem:[#allocation4 + $0x18] sm:$0xff] %v489
    %616 = vst.msk [vmem:[%s8] sm:$0xff] %vm41, %v604
    %617 = vst.msk [vmem:[%s8 + $0x8] sm:$0xff] %vm41, %v605
    %618 = vst.msk [vmem:[%s8 + $0x10] sm:$0xff] %vm41, %v606
    %619 = vst.msk [vmem:[%s8 + $0x18] sm:$0xff] %vm41, %v607
    // Predicated region
    $region26: #{forward.4} parent=1 // pred_check
      _
    $region27: #{forward.4} parent=1 // pred_check_branch
      %621 = sbr.rel (0) target = $region29
    $region28: #{forward.4} parent=1 // pred_region
      %s623 = ssub.s32 512, 512
      %624 = vsyncadd [#allocation3], %s623
      %s625 = sshll.u32 [#allocation2], 4
      %s626 = int_to_ptr.vmem [resolvable:$true] %s625
      %631 = dma.vmem_to_hbm [thread:$0]  %s626, 512, %s6, [#allocation3], 128, 128, 8
    $region29: #{forward.4} parent=1 // pred_fallthru
      _
    // Predicated region
    $region30: #{forward.4} parent=1 // pred_check
      _
    $region31: #{forward.4} parent=1 // pred_check_branch
      %633 = sbr.rel (0) target = $region33
    $region32: #{forward.4} parent=1 // pred_region
      %s635 = ssub.s32 512, 512
      %636 = vsyncadd [#allocation5], %s635
      %s637 = sshll.u32 [#allocation4], 4
      %s638 = int_to_ptr.vmem [resolvable:$true] %s637
      %643 = dma.vmem_to_hbm [thread:$0]  %s638, 512, %s7, [#allocation5], 128, 128, 8
    $region33: #{forward.4} parent=1 // pred_fallthru
      _
    // Predicated region
    $region34: #{forward.4} parent=1 // pred_check
      _
    $region35: #{forward.4} parent=1 // pred_check_branch
      %645 = sbr.rel (0) target = $region37
    $region36: #{forward.4} parent=1 // pred_region
      _
    $region37: #{forward.4} parent=1 // pred_fallthru
      _
    // Predicated region
    $region38: #{forward.4} parent=1 // pred_check
      _
    $region39: #{forward.4} parent=1 // pred_check_branch
      %647 = sbr.rel (0) target = $region41
    $region40: #{forward.4} parent=1 // pred_region
      %648 = dma.done [#allocation3], 512
    $region41: #{forward.4} parent=1 // pred_fallthru
      _
    // Predicated region
    $region42: #{forward.4} parent=1 // pred_check
      _
    $region43: #{forward.4} parent=1 // pred_check_branch
      %650 = sbr.rel (0) target = $region45
    $region44: #{forward.4} parent=1 // pred_region
      %651 = dma.done [#allocation5], 512
    $region45: #{forward.4} parent=1 // pred_fallthru
      _
    // Predicated region
    $region46: #{forward.4} parent=1 // pred_check
      _
    $region47: #{forward.4} parent=1 // pred_check_branch
      %653 = sbr.rel (0) target = $region49
    $region48: #{forward.4} parent=1 // pred_region
      _
    $region49: #{forward.4} parent=1 // pred_fallthru
      _
    %654 = vsyncpa [#allocation3], 1
    %655 = vsyncpa [#allocation5], 1

// kernel: forward.6
$region0: #{forward.6}
  #allocation0 [shape = 'u32[]', space=smem, size = 0x4, offset = 0x4, fixed_abs, tag = 'smem constant byte address 0x4 - core index']
  #allocation1 [shape = 'u32[144,128]{1,0:T(1,128)}', space=vmem, size = 0x12000, scoped, tag = 'internal scratch']
  %s0 = inlined_call_operand.vmem [shape: f32[1,1024], index: 0, kind: input, shape index: {}]
  %s1 = inlined_call_operand.vmem [shape: f32[1,1024], index: 1, kind: input, shape index: {}]
  %s2 = inlined_call_operand.vmem [shape: f32[2,1024], index: 2, kind: input, shape index: {}]
  %s3 = inlined_call_operand.vmem [shape: f32[2,1024], index: 3, kind: input, shape index: {}]
  %s4 = inlined_call_operand.vmem [shape: f32[2,1024], index: 4, kind: output, shape index: {0}]
  %s5 = inlined_call_operand.vmem [shape: f32[2,1024], index: 5, kind: output, shape index: {1}]
  %6 = xla_tuple %s4, %s5
  %s7 = sld [smem:[#allocation0]]
  $region34: #{forward.6} parent=0
    _
  %s9 = ssub.s32 1, %s7
  %s10 = scalar_select 0, %s9, %s7
  // Predicated region
  $region2: #{forward.6} parent=0 // pred_check
    _
  $region3: #{forward.6} parent=0 // pred_check_branch
    %12 = sbr.rel (0) target = $region5
  $region4: #{forward.6} parent=0 // pred_region
    _
  $region5: #{forward.6} parent=0 // pred_fallthru
    _
  // Predicated region
  $region6: #{forward.6} parent=0 // pred_check
    _
  $region7: #{forward.6} parent=0 // pred_check_branch
    %14 = sbr.rel (0) target = $region9
  $region8: #{forward.6} parent=0 // pred_region
    _
  $region9: #{forward.6} parent=0 // pred_fallthru
    _
  // Predicated region
  $region10: #{forward.6} parent=0 // pred_check
    _
  $region11: #{forward.6} parent=0 // pred_check_branch
    %16 = sbr.rel (0) target = $region13
  $region12: #{forward.6} parent=0 // pred_region
    _
  $region13: #{forward.6} parent=0 // pred_fallthru
    _
  // Predicated region
  $region14: #{forward.6} parent=0 // pred_check
    _
  $region15: #{forward.6} parent=0 // pred_check_branch
    %18 = sbr.rel (0) target = $region17
  $region16: #{forward.6} parent=0 // pred_region
    _
  $region17: #{forward.6} parent=0 // pred_fallthru
    _
  %v19 = vld [vmem:[%s0] sm:$0xff]
  %v20 = vld [vmem:[%s1] sm:$0xff]
  %v21 = vld [vmem:[%s2] sm:$0xff]
  %v22 = vld [vmem:[%s2 + $0x8] sm:$0xff]
  %v23 = vld [vmem:[%s3] sm:$0xff]
  %v24 = vld [vmem:[%s3 + $0x8] sm:$0xff]
  %v26 = vlaneseq
  %v27 = vshrl.u32 %v26, 7
  %v28 = vsub.s32 0, %v27
  %v29 = vrot.slane %v19, %v28
  %v30 = vlaneseq
  %v31 = vshrl.u32 %v30, 7
  %v32 = vsub.s32 1, %v31
  %v33 = vrot.slane %v19, %v32
  %v34 = vlaneseq
  %v35 = vshrl.u32 %v34, 7
  %v36 = vsub.s32 2, %v35
  %v37 = vrot.slane %v19, %v36
  %v38 = vlaneseq
  %v39 = vshrl.u32 %v38, 7
  %v40 = vsub.s32 3, %v39
  %v41 = vrot.slane %v19, %v40
  %v42 = vlaneseq
  %v43 = vshrl.u32 %v42, 7
  %v44 = vsub.s32 4, %v43
  %v45 = vrot.slane %v19, %v44
  %v46 = vlaneseq
  %v47 = vshrl.u32 %v46, 7
  %v48 = vsub.s32 5, %v47
  %v49 = vrot.slane %v19, %v48
  %v50 = vlaneseq
  %v51 = vshrl.u32 %v50, 7
  %v52 = vsub.s32 6, %v51
  %v53 = vrot.slane %v19, %v52
  %v54 = vlaneseq
  %v55 = vshrl.u32 %v54, 7
  %v56 = vsub.s32 7, %v55
  %v57 = vrot.slane %v19, %v56
  %v68 = vcombine.high %v21, %v21
  %v70 = vunpack.c.l.s4 1983009808
  %v71 = vunpack.c.0.s8 %v70
  %v72 = vlaneseq
  %v73 = vshrl.u32 %v72, 7
  %v74 = vsub.s32 %v71, %v73
  %v75 = vrot.slane %v21, %v74
  %v77 = vunpack.c.l.s4 1983009808
  %v78 = vunpack.c.0.s8 %v77
  %v79 = vlaneseq
  %v80 = vshrl.u32 %v79, 7
  %v81 = vsub.s32 %v78, %v80
  %v82 = vrot.slane %v68, %v81
  %v83 = vcombine.high %v75, %v75
  %v84 = vcombine.high %v82, %v82
  %v85 = vcombine.high %v22, %v22
  %v87 = vunpack.c.l.s4 1983009808
  %v88 = vunpack.c.0.s8 %v87
  %v89 = vlaneseq
  %v90 = vshrl.u32 %v89, 7
  %v91 = vsub.s32 %v88, %v90
  %v92 = vrot.slane %v22, %v91
  %v94 = vunpack.c.l.s4 1983009808
  %v95 = vunpack.c.0.s8 %v94
  %v96 = vlaneseq
  %v97 = vshrl.u32 %v96, 7
  %v98 = vsub.s32 %v95, %v97
  %v99 = vrot.slane %v85, %v98
  %v100 = vcombine.high %v92, %v92
  %v101 = vcombine.high %v99, %v99
  %v110 = vmul.f32 %v29, %v75
  %v111 = vmul.f32 %v33, %v83
  %v112 = vmul.f32 %v37, %v82
  %v113 = vmul.f32 %v41, %v84
  %v114 = vmul.f32 %v45, %v92
  %v115 = vmul.f32 %v49, %v100
  %v116 = vmul.f32 %v53, %v99
  %v117 = vmul.f32 %v57, %v101
  %v119 = vlaneseq
  %v120 = vshrl.u32 %v119, 7
  %v121 = vsub.s32 0, %v120
  %v122 = vrot.slane %v20, %v121
  %v123 = vlaneseq
  %v124 = vshrl.u32 %v123, 7
  %v125 = vsub.s32 1, %v124
  %v126 = vrot.slane %v20, %v125
  %v127 = vlaneseq
  %v128 = vshrl.u32 %v127, 7
  %v129 = vsub.s32 2, %v128
  %v130 = vrot.slane %v20, %v129
  %v131 = vlaneseq
  %v132 = vshrl.u32 %v131, 7
  %v133 = vsub.s32 3, %v132
  %v134 = vrot.slane %v20, %v133
  %v135 = vlaneseq
  %v136 = vshrl.u32 %v135, 7
  %v137 = vsub.s32 4, %v136
  %v138 = vrot.slane %v20, %v137
  %v139 = vlaneseq
  %v140 = vshrl.u32 %v139, 7
  %v141 = vsub.s32 5, %v140
  %v142 = vrot.slane %v20, %v141
  %v143 = vlaneseq
  %v144 = vshrl.u32 %v143, 7
  %v145 = vsub.s32 6, %v144
  %v146 = vrot.slane %v20, %v145
  %v147 = vlaneseq
  %v148 = vshrl.u32 %v147, 7
  %v149 = vsub.s32 7, %v148
  %v150 = vrot.slane %v20, %v149
  %v161 = vcombine.high %v23, %v23
  %v163 = vunpack.c.l.s4 1983009808
  %v164 = vunpack.c.0.s8 %v163
  %v165 = vlaneseq
  %v166 = vshrl.u32 %v165, 7
  %v167 = vsub.s32 %v164, %v166
  %v168 = vrot.slane %v23, %v167
  %v170 = vunpack.c.l.s4 1983009808
  %v171 = vunpack.c.0.s8 %v170
  %v172 = vlaneseq
  %v173 = vshrl.u32 %v172, 7
  %v174 = vsub.s32 %v171, %v173
  %v175 = vrot.slane %v161, %v174
  %v176 = vcombine.high %v168, %v168
  %v177 = vcombine.high %v175, %v175
  %v178 = vcombine.high %v24, %v24
  %v180 = vunpack.c.l.s4 1983009808
  %v181 = vunpack.c.0.s8 %v180
  %v182 = vlaneseq
  %v183 = vshrl.u32 %v182, 7
  %v184 = vsub.s32 %v181, %v183
  %v185 = vrot.slane %v24, %v184
  %v187 = vunpack.c.l.s4 1983009808
  %v188 = vunpack.c.0.s8 %v187
  %v189 = vlaneseq
  %v190 = vshrl.u32 %v189, 7
  %v191 = vsub.s32 %v188, %v190
  %v192 = vrot.slane %v178, %v191
  %v193 = vcombine.high %v185, %v185
  %v194 = vcombine.high %v192, %v192
  %v203 = vmul.f32 %v122, %v168
  %v204 = vmul.f32 %v126, %v176
  %v205 = vmul.f32 %v130, %v175
  %v206 = vmul.f32 %v134, %v177
  %v207 = vmul.f32 %v138, %v185
  %v208 = vmul.f32 %v142, %v193
  %v209 = vmul.f32 %v146, %v192
  %v210 = vmul.f32 %v150, %v194
  %v211 = vsub.f32 %v110, %v203
  %v212 = vsub.f32 %v111, %v204
  %v213 = vsub.f32 %v112, %v205
  %v214 = vsub.f32 %v113, %v206
  %v215 = vsub.f32 %v114, %v207
  %v216 = vsub.f32 %v115, %v208
  %v217 = vsub.f32 %v116, %v209
  %v218 = vsub.f32 %v117, %v210
  %v227 = vcombine.low %v211, %v212
  %v228 = vcombine.low %v213, %v214
  %v230 = vunpack.c.l.s4 1983009808
  %v231 = vunpack.c.0.s8 %v230
  %v232 = vlaneseq
  %v233 = vshrl.u32 %v232, 7
  %v234 = vsub.s32 %v231, %v233
  %v235 = vrot.slane %v227, %v234
  %v237 = vunpack.c.l.s4 1983009808
  %v238 = vunpack.c.0.s8 %v237
  %v239 = vlaneseq
  %v240 = vshrl.u32 %v239, 7
  %v241 = vsub.s32 %v238, %v240
  %v242 = vrot.slane %v228, %v241
  %v243 = vcombine.low %v235, %v242
  %v244 = vcombine.low %v215, %v216
  %v245 = vcombine.low %v217, %v218
  %v247 = vunpack.c.l.s4 1983009808
  %v248 = vunpack.c.0.s8 %v247
  %v249 = vlaneseq
  %v250 = vshrl.u32 %v249, 7
  %v251 = vsub.s32 %v248, %v250
  %v252 = vrot.slane %v244, %v251
  %v254 = vunpack.c.l.s4 1983009808
  %v255 = vunpack.c.0.s8 %v254
  %v256 = vlaneseq
  %v257 = vshrl.u32 %v256, 7
  %v258 = vsub.s32 %v255, %v257
  %v259 = vrot.slane %v245, %v258
  %v260 = vcombine.low %v252, %v259
  %263 = vst [vmem:[%s4] sm:$0xff] %v243
  %264 = vst [vmem:[%s4 + $0x8] sm:$0xff] %v260
  %v265 = vmul.f32 %v29, %v168
  %v266 = vmul.f32 %v33, %v176
  %v267 = vmul.f32 %v37, %v175
  %v268 = vmul.f32 %v41, %v177
  %v269 = vmul.f32 %v45, %v185
  %v270 = vmul.f32 %v49, %v193
  %v271 = vmul.f32 %v53, %v192
  %v272 = vmul.f32 %v57, %v194
  %v273 = vmul.f32 %v122, %v75
  %v274 = vmul.f32 %v126, %v83
  %v275 = vmul.f32 %v130, %v82
  %v276 = vmul.f32 %v134, %v84
  %v277 = vmul.f32 %v138, %v92
  %v278 = vmul.f32 %v142, %v100
  %v279 = vmul.f32 %v146, %v99
  %v280 = vmul.f32 %v150, %v101
  %v281 = vadd.f32 %v265, %v273
  %v282 = vadd.f32 %v266, %v274
  %v283 = vadd.f32 %v267, %v275
  %v284 = vadd.f32 %v268, %v276
  %v285 = vadd.f32 %v269, %v277
  %v286 = vadd.f32 %v270, %v278
  %v287 = vadd.f32 %v271, %v279
  %v288 = vadd.f32 %v272, %v280
  %v297 = vcombine.low %v281, %v282
  %v298 = vcombine.low %v283, %v284
  %v300 = vunpack.c.l.s4 1983009808
  %v301 = vunpack.c.0.s8 %v300
  %v302 = vlaneseq
  %v303 = vshrl.u32 %v302, 7
  %v304 = vsub.s32 %v301, %v303
  %v305 = vrot.slane %v297, %v304
  %v307 = vunpack.c.l.s4 1983009808
  %v308 = vunpack.c.0.s8 %v307
  %v309 = vlaneseq
  %v310 = vshrl.u32 %v309, 7
  %v311 = vsub.s32 %v308, %v310
  %v312 = vrot.slane %v298, %v311
  %v313 = vcombine.low %v305, %v312
  %v314 = vcombine.low %v285, %v286
  %v315 = vcombine.low %v287, %v288
  %v317 = vunpack.c.l.s4 1983009808
  %v318 = vunpack.c.0.s8 %v317
  %v319 = vlaneseq
  %v320 = vshrl.u32 %v319, 7
  %v321 = vsub.s32 %v318, %v320
  %v322 = vrot.slane %v314, %v321
  %v324 = vunpack.c.l.s4 1983009808
  %v325 = vunpack.c.0.s8 %v324
  %v326 = vlaneseq
  %v327 = vshrl.u32 %v326, 7
  %v328 = vsub.s32 %v325, %v327
  %v329 = vrot.slane %v315, %v328
  %v330 = vcombine.low %v322, %v329
  %333 = vst [vmem:[%s5] sm:$0xff] %v313
  %334 = vst [vmem:[%s5 + $0x8] sm:$0xff] %v330
  // Predicated region
  $region18: #{forward.6} parent=0 // pred_check
    _
  $region19: #{forward.6} parent=0 // pred_check_branch
    %336 = sbr.rel (0) target = $region21
  $region20: #{forward.6} parent=0 // pred_region
    _
  $region21: #{forward.6} parent=0 // pred_fallthru
    _
  // Predicated region
  $region22: #{forward.6} parent=0 // pred_check
    _
  $region23: #{forward.6} parent=0 // pred_check_branch
    %338 = sbr.rel (0) target = $region25
  $region24: #{forward.6} parent=0 // pred_region
    _
  $region25: #{forward.6} parent=0 // pred_fallthru
    _
  // Predicated region
  $region26: #{forward.6} parent=0 // pred_check
    _
  $region27: #{forward.6} parent=0 // pred_check_branch
    %340 = sbr.rel (0) target = $region29
  $region28: #{forward.6} parent=0 // pred_region
    _
  $region29: #{forward.6} parent=0 // pred_fallthru
    _
  // Predicated region
  $region30: #{forward.6} parent=0 // pred_check
    _
  $region31: #{forward.6} parent=0 // pred_check_branch
    %342 = sbr.rel (0) target = $region33
  $region32: #{forward.6} parent=0 // pred_region
    _
  $region33: #{forward.6} parent=0 // pred_fallthru
    _

// kernel: forward.7
$region0: #{forward.7}
  #allocation0 [shape = 'u32[]', space=smem, size = 0x4, offset = 0x4, fixed_abs, tag = 'smem constant byte address 0x4 - core index']
  #allocation1 [shape = 'u32[144,128]{1,0:T(1,128)}', space=vmem, size = 0x12000, scoped, tag = 'internal scratch']
  %s0 = inlined_call_operand.vmem [shape: f32[2,32,32], index: 0, kind: input, shape index: {}]
  %s1 = inlined_call_operand.vmem [shape: f32[2,32,32], index: 1, kind: input, shape index: {}]
  %s2 = inlined_call_operand.hbm [shape: f32[2,16,16], index: 2, kind: output, shape index: {}]
  %s3 = sld [smem:[#allocation0]]
  $region94: #{forward.7} parent=0
    _
  %s5 = ssub.s32 1, %s3
  %s6 = scalar_select 0, %s5, %s3
  $region1: #{forward.7} parent=0
    #allocation2 [shape = 'u8[16384]{0}', space=vmem, size = 0x4000, scoped, tag = 'input window, operand 0, single buffered']
    #allocation3 [shape = 'u8[16384]{0}', space=vmem, size = 0x4000, scoped, tag = 'input window, operand 1, single buffered']
    #allocation4 [shape = 'u8[16384]{0}', space=vmem, size = 0x4000, scoped, tag = 'output window, operand 0, single buffered']
    #allocation5 [shape = 's32[1]{0}', space=sflag, size = 0x4, scoped, tag = 'scoped memory for forward.7']
    %7 = vsyncpa [#allocation5], 0
    // Predicated region
    $region2: #{forward.7} parent=1 // pred_check
      _
    $region3: #{forward.7} parent=1 // pred_check_branch
      %9 = sbr.rel (0) target = $region5
    $region4: #{forward.7} parent=1 // pred_region
      // Predicated region
      $region6: #{forward.7} parent=4 // pred_check
        _
      $region7: #{forward.7} parent=4 // pred_check_branch
        %11 = sbr.rel (0) target = $region9
      $region8: #{forward.7} parent=4 // pred_region
        // Predicated region
        $region10: #{forward.7} parent=8 // pred_check
          _
        $region11: #{forward.7} parent=8 // pred_check_branch
          %13 = sbr.rel (0) target = $region13
        $region12: #{forward.7} parent=8 // pred_region
          // Predicated region
          $region25: #{forward.7} parent=12 // pred_check
            _
          $region26: #{forward.7} parent=12 // pred_check_branch
            %34 = sbr.rel (0) target = $region28
          $region27: #{forward.7} parent=12 // pred_region
            loop: start=0, step=1, limit=1
            $region29: #{forward.7} parent=27 // loop_pre_header
              _
            $region30: #{forward.7} parent=27 // loop_header
              %s36 = sphi 0, %s40
              %p37 = scmp.ge.s32.totalorder %s36, 1
              %s41 = sphi %s0, %s0
              %s42 = sphi [#allocation2], [#allocation2]
            $region31: #{forward.7} parent=27 // loop_header_branch
              %39 = sbr.rel (%p37) target = $region35
            $region32: #{forward.7} parent=27 // loop_body
              %v43 = vld [vmem:[%s41] sm:$0xff]
              %44 = vst [vmem:[%s42] sm:$0xff] %v43
              %v45 = vld [vmem:[%s41 + $0x8] sm:$0xff]
              %46 = vst [vmem:[%s42 + $0x8] sm:$0xff] %v45
              %v47 = vld [vmem:[%s41 + $0x20] sm:$0xff]
              %48 = vst [vmem:[%s42 + $0x10] sm:$0xff] %v47
              %v49 = vld [vmem:[%s41 + $0x28] sm:$0xff]
              %50 = vst [vmem:[%s42 + $0x18] sm:$0xff] %v49
            $region33: #{forward.7} parent=27 // loop_footer
              %s40 = sadd.s32 1, %s36
            $region34: #{forward.7} parent=27 // loop_footer_branch
              %35 = sbr.rel target = $region30
            $region35: #{forward.7} parent=27 // loop_exit
              _
          $region28: #{forward.7} parent=12 // pred_fallthru
            _
          // Predicated region
          $region36: #{forward.7} parent=12 // pred_check
            _
          $region37: #{forward.7} parent=12 // pred_check_branch
            %52 = sbr.rel target = $region39
          $region38: #{forward.7} parent=12 // pred_region
            _
          $region39: #{forward.7} parent=12 // pred_fallthru
            _
        $region13: #{forward.7} parent=8 // pred_fallthru
          _
        // Predicated region
        $region14: #{forward.7} parent=8 // pred_check
          _
        $region15: #{forward.7} parent=8 // pred_check_branch
          %15 = sbr.rel target = $region17
        $region16: #{forward.7} parent=8 // pred_region
          loop: start=0, step=1, limit=1
          $region18: #{forward.7} parent=16 // loop_pre_header
            _
          $region19: #{forward.7} parent=16 // loop_header
            %s18 = sphi 0, %s22
            %p19 = scmp.ge.s32.totalorder %s18, 1
            %s23 = sphi %s0, %s0
            %s24 = sphi [#allocation2], [#allocation2]
          $region20: #{forward.7} parent=16 // loop_header_branch
            %21 = sbr.rel (%p19) target = $region24
          $region21: #{forward.7} parent=16 // loop_body
            %v25 = vld [vmem:[%s23] sm:$0xff]
            %26 = vst [vmem:[%s24] sm:$0xff] %v25
            %v27 = vld [vmem:[%s23 + $0x8] sm:$0xff]
            %28 = vst [vmem:[%s24 + $0x8] sm:$0xff] %v27
            %v29 = vld [vmem:[%s23 + $0x20] sm:$0xff]
            %30 = vst [vmem:[%s24 + $0x10] sm:$0xff] %v29
            %v31 = vld [vmem:[%s23 + $0x28] sm:$0xff]
            %32 = vst [vmem:[%s24 + $0x18] sm:$0xff] %v31
          $region22: #{forward.7} parent=16 // loop_footer
            %s22 = sadd.s32 1, %s18
          $region23: #{forward.7} parent=16 // loop_footer_branch
            %17 = sbr.rel target = $region19
          $region24: #{forward.7} parent=16 // loop_exit
            _
        $region17: #{forward.7} parent=8 // pred_fallthru
          _
      $region9: #{forward.7} parent=4 // pred_fallthru
        _
      %53 = vnop
    $region5: #{forward.7} parent=1 // pred_fallthru
      _
    // Predicated region
    $region40: #{forward.7} parent=1 // pred_check
      _
    $region41: #{forward.7} parent=1 // pred_check_branch
      %55 = sbr.rel (0) target = $region43
    $region42: #{forward.7} parent=1 // pred_region
      // Predicated region
      $region44: #{forward.7} parent=42 // pred_check
        _
      $region45: #{forward.7} parent=42 // pred_check_branch
        %57 = sbr.rel (0) target = $region47
      $region46: #{forward.7} parent=42 // pred_region
        // Predicated region
        $region48: #{forward.7} parent=46 // pred_check
          _
        $region49: #{forward.7} parent=46 // pred_check_branch
          %59 = sbr.rel (0) target = $region51
        $region50: #{forward.7} parent=46 // pred_region
          // Predicated region
          $region63: #{forward.7} parent=50 // pred_check
            _
          $region64: #{forward.7} parent=50 // pred_check_branch
            %80 = sbr.rel (0) target = $region66
          $region65: #{forward.7} parent=50 // pred_region
            loop: start=0, step=1, limit=1
            $region67: #{forward.7} parent=65 // loop_pre_header
              _
            $region68: #{forward.7} parent=65 // loop_header
              %s82 = sphi 0, %s86
              %p83 = scmp.ge.s32.totalorder %s82, 1
              %s87 = sphi %s1, %s1
              %s88 = sphi [#allocation3], [#allocation3]
            $region69: #{forward.7} parent=65 // loop_header_branch
              %85 = sbr.rel (%p83) target = $region73
            $region70: #{forward.7} parent=65 // loop_body
              %v89 = vld [vmem:[%s87] sm:$0xff]
              %90 = vst [vmem:[%s88] sm:$0xff] %v89
              %v91 = vld [vmem:[%s87 + $0x8] sm:$0xff]
              %92 = vst [vmem:[%s88 + $0x8] sm:$0xff] %v91
              %v93 = vld [vmem:[%s87 + $0x20] sm:$0xff]
              %94 = vst [vmem:[%s88 + $0x10] sm:$0xff] %v93
              %v95 = vld [vmem:[%s87 + $0x28] sm:$0xff]
              %96 = vst [vmem:[%s88 + $0x18] sm:$0xff] %v95
            $region71: #{forward.7} parent=65 // loop_footer
              %s86 = sadd.s32 1, %s82
            $region72: #{forward.7} parent=65 // loop_footer_branch
              %81 = sbr.rel target = $region68
            $region73: #{forward.7} parent=65 // loop_exit
              _
          $region66: #{forward.7} parent=50 // pred_fallthru
            _
          // Predicated region
          $region74: #{forward.7} parent=50 // pred_check
            _
          $region75: #{forward.7} parent=50 // pred_check_branch
            %98 = sbr.rel target = $region77
          $region76: #{forward.7} parent=50 // pred_region
            _
          $region77: #{forward.7} parent=50 // pred_fallthru
            _
        $region51: #{forward.7} parent=46 // pred_fallthru
          _
        // Predicated region
        $region52: #{forward.7} parent=46 // pred_check
          _
        $region53: #{forward.7} parent=46 // pred_check_branch
          %61 = sbr.rel target = $region55
        $region54: #{forward.7} parent=46 // pred_region
          loop: start=0, step=1, limit=1
          $region56: #{forward.7} parent=54 // loop_pre_header
            _
          $region57: #{forward.7} parent=54 // loop_header
            %s64 = sphi 0, %s68
            %p65 = scmp.ge.s32.totalorder %s64, 1
            %s69 = sphi %s1, %s1
            %s70 = sphi [#allocation3], [#allocation3]
          $region58: #{forward.7} parent=54 // loop_header_branch
            %67 = sbr.rel (%p65) target = $region62
          $region59: #{forward.7} parent=54 // loop_body
            %v71 = vld [vmem:[%s69] sm:$0xff]
            %72 = vst [vmem:[%s70] sm:$0xff] %v71
            %v73 = vld [vmem:[%s69 + $0x8] sm:$0xff]
            %74 = vst [vmem:[%s70 + $0x8] sm:$0xff] %v73
            %v75 = vld [vmem:[%s69 + $0x20] sm:$0xff]
            %76 = vst [vmem:[%s70 + $0x10] sm:$0xff] %v75
            %v77 = vld [vmem:[%s69 + $0x28] sm:$0xff]
            %78 = vst [vmem:[%s70 + $0x18] sm:$0xff] %v77
          $region60: #{forward.7} parent=54 // loop_footer
            %s68 = sadd.s32 1, %s64
          $region61: #{forward.7} parent=54 // loop_footer_branch
            %63 = sbr.rel target = $region57
          $region62: #{forward.7} parent=54 // loop_exit
            _
        $region55: #{forward.7} parent=46 // pred_fallthru
          _
      $region47: #{forward.7} parent=42 // pred_fallthru
        _
      %99 = vnop
    $region43: #{forward.7} parent=1 // pred_fallthru
      _
    // Predicated region
    $region78: #{forward.7} parent=1 // pred_check
      _
    $region79: #{forward.7} parent=1 // pred_check_branch
      %101 = sbr.rel (0) target = $region81
    $region80: #{forward.7} parent=1 // pred_region
      _
    $region81: #{forward.7} parent=1 // pred_fallthru
      _
    // Predicated region
    $region82: #{forward.7} parent=1 // pred_check
      _
    $region83: #{forward.7} parent=1 // pred_check_branch
      %103 = sbr.rel (0) target = $region85
    $region84: #{forward.7} parent=1 // pred_region
      _
    $region85: #{forward.7} parent=1 // pred_fallthru
      _
    %v104 = vld [vmem:[#allocation2] sm:$0xff]
    %v105 = vld [vmem:[#allocation2 + $0x8] sm:$0xff]
    %v106 = vld [vmem:[#allocation2 + $0x10] sm:$0xff]
    %v107 = vld [vmem:[#allocation2 + $0x18] sm:$0xff]
    %v108 = vld [vmem:[#allocation3] sm:$0xff]
    %v109 = vld [vmem:[#allocation3 + $0x8] sm:$0xff]
    %v110 = vld [vmem:[#allocation3 + $0x10] sm:$0xff]
    %v111 = vld [vmem:[#allocation3 + $0x18] sm:$0xff]
    %v112 = vmul.f32 %v104, %v104
    %v113 = vmul.f32 %v105, %v105
    %v114 = vmul.f32 %v106, %v106
    %v115 = vmul.f32 %v107, %v107
    %v116 = vmul.f32 %v108, %v108
    %v117 = vmul.f32 %v109, %v109
    %v118 = vmul.f32 %v110, %v110
    %v119 = vmul.f32 %v111, %v111
    %v120 = vadd.f32 %v112, %v116
    %v121 = vadd.f32 %v113, %v117
    %v122 = vadd.f32 %v114, %v118
    %v123 = vadd.f32 %v115, %v119
    %v124 = vmul.f32 %v120, 0.95
    %v125 = vmul.f32 %v121, 0.95
    %v126 = vmul.f32 %v122, 0.95
    %v127 = vmul.f32 %v123, 0.95
    %v128 = vrsqrt.pop %v124
    %v129 = vmul.f32 %v124, %v128
    %vm130 = vcmp.eq.f32.partialorder %v124, inf
    %v131 = vsel %vm130, %v124, %v129
    %vm132 = vcmp.eq.f32.partialorder %v124, 0.0
    %v133 = vand.u32 %v124, 2147483648
    %v134 = vsel %vm132, %v133, %v131
    %v135 = vrsqrt.pop %v125
    %v136 = vmul.f32 %v125, %v135
    %vm137 = vcmp.eq.f32.partialorder %v125, inf
    %v138 = vsel %vm137, %v125, %v136
    %vm139 = vcmp.eq.f32.partialorder %v125, 0.0
    %v140 = vand.u32 %v125, 2147483648
    %v141 = vsel %vm139, %v140, %v138
    %v142 = vrsqrt.pop %v126
    %v143 = vmul.f32 %v126, %v142
    %vm144 = vcmp.eq.f32.partialorder %v126, inf
    %v145 = vsel %vm144, %v126, %v143
    %vm146 = vcmp.eq.f32.partialorder %v126, 0.0
    %v147 = vand.u32 %v126, 2147483648
    %v148 = vsel %vm146, %v147, %v145
    %v149 = vrsqrt.pop %v127
    %v150 = vmul.f32 %v127, %v149
    %vm151 = vcmp.eq.f32.partialorder %v127, inf
    %v152 = vsel %vm151, %v127, %v150
    %vm153 = vcmp.eq.f32.partialorder %v127, 0.0
    %v154 = vand.u32 %v127, 2147483648
    %v155 = vsel %vm153, %v154, %v152
    %vm156 = vcmask 130048
    %157 = vst.msk [vmem:[#allocation4] sm:$0xff] %vm156, %v134
    %158 = vst.msk [vmem:[#allocation4 + $0x8] sm:$0xff] %vm156, %v141
    %159 = vst.msk [vmem:[#allocation4 + $0x10] sm:$0xff] %vm156, %v148
    %160 = vst.msk [vmem:[#allocation4 + $0x18] sm:$0xff] %vm156, %v155
    // Predicated region
    $region86: #{forward.7} parent=1 // pred_check
      _
    $region87: #{forward.7} parent=1 // pred_check_branch
      %162 = sbr.rel (0) target = $region89
    $region88: #{forward.7} parent=1 // pred_region
      %s164 = ssub.s32 512, 512
      %165 = vsyncadd [#allocation5], %s164
      %s166 = sshll.u32 [#allocation4], 4
      %s167 = int_to_ptr.vmem [resolvable:$true] %s166
      %172 = dma.vmem_to_hbm [thread:$0]  %s167, 512, %s2, [#allocation5], 128, 128, 8
    $region89: #{forward.7} parent=1 // pred_fallthru
      _
    // Predicated region
    $region90: #{forward.7} parent=1 // pred_check
      _
    $region91: #{forward.7} parent=1 // pred_check_branch
      %174 = sbr.rel (0) target = $region93
    $region92: #{forward.7} parent=1 // pred_region
      %175 = dma.done [#allocation5], 512
    $region93: #{forward.7} parent=1 // pred_fallthru
      _
    %176 = vsyncpa [#allocation5], 1

</llo_original>
